<compile_context>
chip_gen: v5e
topology: v5e:2x2
jax: 0.10.0
libtpu: 0.0.40
codegen_flags: <defaults>
</compile_context>

<pallas_src>
import functools
import math

import jax
import jax.numpy as jnp
from jax import lax
from jax.experimental import pallas as pl
from jax.experimental.pallas import tpu as pltpu


# ---------------------------------------------------------------------------
# elementwise helpers
# ---------------------------------------------------------------------------
_SQRT_2_OVER_PI = math.sqrt(2.0 / math.pi)


def _gelu_tanh(x):
    # tanh-approximate GELU (runs on the EUP); differs from exact erf-GELU by <~5e-4 abs.
    return 0.5 * x * (1.0 + jnp.tanh(_SQRT_2_OVER_PI * (x + 0.044715 * x * x * x)))


def _layernorm(x, g, b, eps=1e-5):
    mu = jnp.mean(x, axis=-1, keepdims=True)
    var = jnp.mean((x - mu) ** 2, axis=-1, keepdims=True)
    return (x - mu) * lax.rsqrt(var + eps) * g + b


# ---------------------------------------------------------------------------
# Pallas kernel: one full transformer block for one batch sample
# ---------------------------------------------------------------------------
def block_kernel(x_ref,
                 g1_ref, b1_ref,
                 wqkv_ref, bqkv_ref,
                 wproj_ref, bproj_ref,
                 g2_ref, b2_ref,
                 wfc1_ref, bfc1_ref,
                 wfc2_ref, bfc2_ref,
                 out_ref,
                 attn_scratch,            # VMEM (N, D) f32
                 *, n_heads):
    x = x_ref[0]                          # (N, D) float32
    N, D = x.shape
    hd = D // n_heads
    scale = hd ** (-0.5)
    cdt = wqkv_ref.dtype                  # matmul-operand dtype (f32 or bf16)

    # hoist parameter loads (loaded once per grid step, reused below)
    g1 = g1_ref[...]
    b1 = b1_ref[...]
    g2 = g2_ref[...]
    b2 = b2_ref[...]
    bqkv = bqkv_ref[...]
    bproj = bproj_ref[...]
    bfc1 = bfc1_ref[...]
    bfc2 = bfc2_ref[...]

    # ---------------- attention branch ----------------
    xn = _layernorm(x, g1, b1)
    # one full-width MXU matmul: (N, D) @ (D, 3D); weights already (in, out) -> no .T
    qkv = jnp.dot(xn.astype(cdt), wqkv_ref[...],
                  preferred_element_type=jnp.float32) + bqkv          # (N, 3D) f32

    # qkv column layout: [q(all heads) | k(all heads) | v(all heads)], head h at h*hd.
    # Small O(N^2 * hd) core -> static per-head loop; outputs written to scratch columns.
    for h in range(n_heads):
        q = (qkv[:, h * hd:(h + 1) * hd] * scale).astype(cdt)          # scale folded into q
        k = qkv[:, D + h * hd:D + (h + 1) * hd].astype(cdt)
        v = qkv[:, 2 * D + h * hd:2 * D + (h + 1) * hd].astype(cdt)
        # q @ k^T without materializing a transpose (contract last dims on the MXU)
        s = lax.dot_general(q, k, (((1,), (1,)), ((), ())),
                            preferred_element_type=jnp.float32)        # (N, N) f32
        s = s - jnp.max(s, axis=-1, keepdims=True)
        p = jnp.exp(s)
        p = p * pl.reciprocal(jnp.sum(p, axis=-1, keepdims=True), approx=True)
        attn_scratch[:, h * hd:(h + 1) * hd] = jnp.dot(
            p.astype(cdt), v, preferred_element_type=jnp.float32)

    attn = jnp.dot(attn_scratch[...].astype(cdt), wproj_ref[...],
                   preferred_element_type=jnp.float32) + bproj
    x1 = x + attn                                                      # residual 1

    # ---------------- MLP branch (fc1 -> GELU -> fc2 -> GELU, per the PyTorch spec) ------
    xn2 = _layernorm(x1, g2, b2)
    h1 = _gelu_tanh(jnp.dot(xn2.astype(cdt), wfc1_ref[...],
                            preferred_element_type=jnp.float32) + bfc1)
    h2 = _gelu_tanh(jnp.dot(h1.astype(cdt), wfc2_ref[...],
                            preferred_element_type=jnp.float32) + bfc2)
    out_ref[0] = x1 + h2                                               # residual 2


PARAM_ORDER = ("ln1_g", "ln1_b", "w_qkv", "b_qkv", "w_proj", "b_proj",
               "ln2_g", "ln2_b", "w_fc1", "b_fc1", "w_fc2", "b_fc2")
WEIGHT_KEYS = ("w_qkv", "w_proj", "w_fc1", "w_fc2")


def vit_block(x, params, n_heads, *, compute_dtype=jnp.float32):
    """Fused ViT block. Params are PyTorch-layout ((out,in) weights, (1,out) biases)."""
    B, N, D = x.shape

    prepared = []
    for key in PARAM_ORDER:
        p = jnp.asarray(params[key])
        if key in WEIGHT_KEYS:
            # Pre-transpose once on the host to (in, out) and cast matmul operands to the
            # requested compute dtype (bf16 recommended on v6e/v7x; f32 acc kept in-kernel).
            p = p.T.astype(compute_dtype)
        else:
            p = p.astype(jnp.float32)     # biases / LN affine stay f32
        prepared.append(p)

    in_specs = [pl.BlockSpec((1, N, D), lambda b: (b, 0, 0))]
    # Parameters: whole-array, VMEM-resident, NOT pipelined -> copied into VMEM once,
    # no double-buffering across grid steps.
    in_specs += [pl.BlockSpec(memory_space=pltpu.MemorySpace.VMEM)] * len(prepared)

    kernel = functools.partial(block_kernel, n_heads=n_heads)
    return pl.pallas_call(
        kernel,
        out_shape=jax.ShapeDtypeStruct((B, N, D), x.dtype),
        grid=(B,),
        in_specs=in_specs,
        out_specs=pl.BlockSpec((1, N, D), lambda b: (b, 0, 0)),
        scratch_shapes=[pltpu.VMEM((N, D), jnp.float32)],   # concat-free head-output slab
        compiler_params=pltpu.CompilerParams(
            dimension_semantics=("parallel",),
            # Raise the scoped-VMEM default (16/32 MiB); kept below v7x's 64 MiB physical.
            vmem_limit_bytes=48 * 1024 * 1024,
        ),
    )(x, *prepared)


# ---------------------------------------------------------------------------
# deterministic parameter init (PyTorch-like shapes/scales)
# ---------------------------------------------------------------------------
def init_params(key, dim, mlp_ratio=4.0):
    hidden = int(dim * mlp_ratio)

    def linear(k, out_f, in_f):
        bound = 1.0 / math.sqrt(in_f)
        kw, kb = jax.random.split(k)
        w = jax.random.uniform(kw, (out_f, in_f), jnp.float32, -bound, bound)
        b = jax.random.uniform(kb, (1, out_f), jnp.float32, -bound, bound)
        return w, b

    k0, k1, k2, k3 = jax.random.split(key, 4)
    w_qkv, b_qkv = linear(k0, 3 * dim, dim)
    w_proj, b_proj = linear(k1, dim, dim)
    w_fc1, b_fc1 = linear(k2, hidden, dim)
    w_fc2, b_fc2 = linear(k3, dim, hidden)
    return dict(
        ln1_g=jnp.ones((1, dim), jnp.float32), ln1_b=jnp.zeros((1, dim), jnp.float32),
        w_qkv=w_qkv, b_qkv=b_qkv, w_proj=w_proj, b_proj=b_proj,
        ln2_g=jnp.ones((1, dim), jnp.float32), ln2_b=jnp.zeros((1, dim), jnp.float32),
        w_fc1=w_fc1, b_fc1=b_fc1, w_fc2=w_fc2, b_fc2=b_fc2,
    )


# ---------------------------------------------------------------------------
# plain-JAX reference: exact-erf GELU, exact softmax, HIGHEST precision
# (matches the PyTorch module's math; kernel uses tanh-GELU + approx reciprocal)
# ---------------------------------------------------------------------------
def vit_block_ref(x, params, n_heads):
    B, N, D = x.shape
    hd = D // n_heads
    scale = hd ** (-0.5)

    def gelu_exact(v):
        return 0.5 * v * (1.0 + jax.scipy.special.erf(v / math.sqrt(2.0)))

    xn = _layernorm(x, params["ln1_g"], params["ln1_b"])
    qkv = jnp.einsum("bnd,od->bno", xn, params["w_qkv"],
                     precision=lax.Precision.HIGHEST) + params["b_qkv"]
    qkv = qkv.reshape(B, N, 3, n_heads, hd)
    q, k, v = [qkv[:, :, i].transpose(0, 2, 1, 3) for i in range(3)]   # (B, H, N, hd)
    s = jnp.einsum("bhqd,bhkd->bhqk", q, k, precision=lax.Precision.HIGHEST) * scale
    s = s - jnp.max(s, axis=-1, keepdims=True)
    p = jnp.exp(s)
    p = p / jnp.sum(p, axis=-1, keepdims=True)
    wavg = jnp.einsum("bhqk,bhkd->bhqd", p, v, precision=lax.Precision.HIGHEST)
    wavg = wavg.transpose(0, 2, 1, 3).reshape(B, N, D)
    attn = jnp.einsum("bnd,od->bno", wavg, params["w_proj"],
                      precision=lax.Precision.HIGHEST) + params["b_proj"]
    x1 = x + attn

    xn2 = _layernorm(x1, params["ln2_g"], params["ln2_b"])
    h1 = gelu_exact(jnp.einsum("bnd,hd->bnh", xn2, params["w_fc1"],
                               precision=lax.Precision.HIGHEST) + params["b_fc1"])
    h2 = gelu_exact(jnp.einsum("bnh,dh->bnd", h1, params["w_fc2"],
                               precision=lax.Precision.HIGHEST) + params["b_fc2"])
    return x1 + h2


if __name__ == "__main__":
    B, N, D, n_heads = 2, 8, 32, 8       # batch, tokens, embed dim, heads (head_dim = 4)
    key = jax.random.PRNGKey(0)
    kx, kp = jax.random.split(key)
    x = jax.random.normal(kx, (B, N, D), jnp.float32)
    params = init_params(kp, D, mlp_ratio=4.0)

    ref = vit_block_ref(x, params, n_heads)

    # f32 compute path. Tolerance covers tanh-GELU vs exact-erf GELU (<~1e-3 end-to-end)
    # and the approximate EUP reciprocal in the softmax normalization.
    out = jax.block_until_ready(vit_block(x, params, n_heads))
    assert out.shape == (B, N, D)
    assert jnp.allclose(out, ref, atol=5e-3, rtol=5e-3), "f32 kernel mismatch vs. reference"

    # bf16 matmul-operand path (recommended on v6e/v7x); loose-tolerance sanity check.
    out_bf16 = jax.block_until_ready(
        vit_block(x, params, n_heads, compute_dtype=jnp.bfloat16))
    assert jnp.allclose(out_bf16, ref, atol=1e-1, rtol=1e-1), "bf16 kernel mismatch vs. reference"

    print("KERNEL_OK")
</pallas_src>

<mosaic_0001>
module attributes {stable_mosaic.version = 11 : i64} {
  func.func @block_kernel(%arg0: i32, %arg1: memref<1x8x32xf32, #tpu.memory_space<vmem>>, %arg2: memref<1x32xf32, #tpu.memory_space<vmem>>, %arg3: memref<1x32xf32, #tpu.memory_space<vmem>>, %arg4: memref<32x96xf32, #tpu.memory_space<vmem>>, %arg5: memref<1x96xf32, #tpu.memory_space<vmem>>, %arg6: memref<32x32xf32, #tpu.memory_space<vmem>>, %arg7: memref<1x32xf32, #tpu.memory_space<vmem>>, %arg8: memref<1x32xf32, #tpu.memory_space<vmem>>, %arg9: memref<1x32xf32, #tpu.memory_space<vmem>>, %arg10: memref<32x128xf32, #tpu.memory_space<vmem>>, %arg11: memref<1x128xf32, #tpu.memory_space<vmem>>, %arg12: memref<128x32xf32, #tpu.memory_space<vmem>>, %arg13: memref<1x32xf32, #tpu.memory_space<vmem>>, %arg14: memref<1x8x32xf32, #tpu.memory_space<vmem>>, %arg15: memref<8x32xf32, #tpu.memory_space<vmem>>) attributes {dimension_semantics = [#tpu.dimension_semantics<parallel>], iteration_bounds = array<i64: 2>, scalar_prefetch = 0 : i64, scratch_operands = 1 : i64, tpu.core_type = #tpu.core_type<tc>, window_params = [{transform_indices = @transform_0, window_bounds = array<i64: 1, 8, 32>}, {pipeline_mode = #tpu.pipeline_mode<synchronous>, transform_indices = @transform_1, window_bounds = array<i64: 1, 32>}, {pipeline_mode = #tpu.pipeline_mode<synchronous>, transform_indices = @transform_2, window_bounds = array<i64: 1, 32>}, {pipeline_mode = #tpu.pipeline_mode<synchronous>, transform_indices = @transform_3, window_bounds = array<i64: 32, 96>}, {pipeline_mode = #tpu.pipeline_mode<synchronous>, transform_indices = @transform_4, window_bounds = array<i64: 1, 96>}, {pipeline_mode = #tpu.pipeline_mode<synchronous>, transform_indices = @transform_5, window_bounds = array<i64: 32, 32>}, {pipeline_mode = #tpu.pipeline_mode<synchronous>, transform_indices = @transform_6, window_bounds = array<i64: 1, 32>}, {pipeline_mode = #tpu.pipeline_mode<synchronous>, transform_indices = @transform_7, window_bounds = array<i64: 1, 32>}, {pipeline_mode = #tpu.pipeline_mode<synchronous>, transform_indices = @transform_8, window_bounds = array<i64: 1, 32>}, {pipeline_mode = #tpu.pipeline_mode<synchronous>, transform_indices = @transform_9, window_bounds = array<i64: 32, 128>}, {pipeline_mode = #tpu.pipeline_mode<synchronous>, transform_indices = @transform_10, window_bounds = array<i64: 1, 128>}, {pipeline_mode = #tpu.pipeline_mode<synchronous>, transform_indices = @transform_11, window_bounds = array<i64: 128, 32>}, {pipeline_mode = #tpu.pipeline_mode<synchronous>, transform_indices = @transform_12, window_bounds = array<i64: 1, 32>}, {transform_indices = @transform_13, window_bounds = array<i64: 1, 8, 32>}]} {
    %c0 = arith.constant 0 : index
    %c0_0 = arith.constant 0 : index
    %c0_1 = arith.constant 0 : index
    %0 = vector.load %arg1[%c0, %c0_0, %c0_1] : memref<1x8x32xf32, #tpu.memory_space<vmem>>, vector<1x8x32xf32>
    %1 = vector.shape_cast %0 : vector<1x8x32xf32> to vector<8x32xf32>
    %c0_2 = arith.constant 0 : index
    %c0_3 = arith.constant 0 : index
    %2 = vector.load %arg2[%c0_2, %c0_3] : memref<1x32xf32, #tpu.memory_space<vmem>>, vector<1x32xf32>
    %c0_4 = arith.constant 0 : index
    %c0_5 = arith.constant 0 : index
    %3 = vector.load %arg3[%c0_4, %c0_5] : memref<1x32xf32, #tpu.memory_space<vmem>>, vector<1x32xf32>
    %c0_6 = arith.constant 0 : index
    %c0_7 = arith.constant 0 : index
    %4 = vector.load %arg8[%c0_6, %c0_7] : memref<1x32xf32, #tpu.memory_space<vmem>>, vector<1x32xf32>
    %c0_8 = arith.constant 0 : index
    %c0_9 = arith.constant 0 : index
    %5 = vector.load %arg9[%c0_8, %c0_9] : memref<1x32xf32, #tpu.memory_space<vmem>>, vector<1x32xf32>
    %c0_10 = arith.constant 0 : index
    %c0_11 = arith.constant 0 : index
    %6 = vector.load %arg5[%c0_10, %c0_11] : memref<1x96xf32, #tpu.memory_space<vmem>>, vector<1x96xf32>
    %c0_12 = arith.constant 0 : index
    %c0_13 = arith.constant 0 : index
    %7 = vector.load %arg7[%c0_12, %c0_13] : memref<1x32xf32, #tpu.memory_space<vmem>>, vector<1x32xf32>
    %c0_14 = arith.constant 0 : index
    %c0_15 = arith.constant 0 : index
    %8 = vector.load %arg11[%c0_14, %c0_15] : memref<1x128xf32, #tpu.memory_space<vmem>>, vector<1x128xf32>
    %c0_16 = arith.constant 0 : index
    %c0_17 = arith.constant 0 : index
    %9 = vector.load %arg13[%c0_16, %c0_17] : memref<1x32xf32, #tpu.memory_space<vmem>>, vector<1x32xf32>
    %cst = arith.constant dense<0.000000e+00> : vector<8xf32>
    %10 = vector.multi_reduction <add>, %1, %cst [1] : vector<8x32xf32> to vector<8xf32>
    %11 = vector.shape_cast %10 : vector<8xf32> to vector<8x1xf32>
    %cst_18 = arith.constant 3.200000e+01 : f32
    %12 = vector.broadcast %cst_18 : f32 to vector<8x1xf32>
    %13 = arith.divf %11, %12 : vector<8x1xf32>
    %14 = vector.broadcast %13 : vector<8x1xf32> to vector<8x32xf32>
    %15 = arith.subf %1, %14 : vector<8x32xf32>
    %16 = arith.mulf %15, %15 : vector<8x32xf32>
    %cst_19 = arith.constant dense<0.000000e+00> : vector<8xf32>
    %17 = vector.multi_reduction <add>, %16, %cst_19 [1] : vector<8x32xf32> to vector<8xf32>
    %18 = vector.shape_cast %17 : vector<8xf32> to vector<8x1xf32>
    %cst_20 = arith.constant 3.200000e+01 : f32
    %19 = vector.broadcast %cst_20 : f32 to vector<8x1xf32>
    %20 = arith.divf %18, %19 : vector<8x1xf32>
    %21 = vector.broadcast %13 : vector<8x1xf32> to vector<8x32xf32>
    %22 = arith.subf %1, %21 : vector<8x32xf32>
    %cst_21 = arith.constant 9.99999974E-6 : f32
    %23 = vector.broadcast %cst_21 : f32 to vector<8x1xf32>
    %24 = arith.addf %20, %23 : vector<8x1xf32>
    %25 = math.rsqrt %24 : vector<8x1xf32>
    %26 = vector.broadcast %25 : vector<8x1xf32> to vector<8x32xf32>
    %27 = arith.mulf %22, %26 : vector<8x32xf32>
    %28 = vector.broadcast %2 : vector<1x32xf32> to vector<8x32xf32>
    %29 = arith.mulf %27, %28 : vector<8x32xf32>
    %30 = vector.broadcast %3 : vector<1x32xf32> to vector<8x32xf32>
    %31 = arith.addf %29, %30 : vector<8x32xf32>
    %c0_22 = arith.constant 0 : index
    %c0_23 = arith.constant 0 : index
    %32 = vector.load %arg4[%c0_22, %c0_23] : memref<32x96xf32, #tpu.memory_space<vmem>>, vector<32x96xf32>
    %cst_24 = arith.constant dense<0.000000e+00> : vector<8x96xf32>
    %33 = tpu.matmul %31, %32, %cst_24 {dimension_numbers = #tpu.dot_dimension_numbers<[1], [0], [0], [1], [0, 0, 1, 1], [], []>} : vector<8x32xf32>, vector<32x96xf32>, vector<8x96xf32> -> vector<8x96xf32>
    %34 = vector.broadcast %6 : vector<1x96xf32> to vector<8x96xf32>
    %35 = arith.addf %33, %34 : vector<8x96xf32>
    %36 = vector.extract_strided_slice %35 {offsets = [0, 0], sizes = [8, 4], strides = [1, 1]} : vector<8x96xf32> to vector<8x4xf32>
    %cst_25 = arith.constant 5.000000e-01 : f32
    %37 = vector.broadcast %cst_25 : f32 to vector<8x4xf32>
    %38 = arith.mulf %36, %37 : vector<8x4xf32>
    %39 = vector.extract_strided_slice %35 {offsets = [0, 32], sizes = [8, 4], strides = [1, 1]} : vector<8x96xf32> to vector<8x4xf32>
    %40 = vector.extract_strided_slice %35 {offsets = [0, 64], sizes = [8, 4], strides = [1, 1]} : vector<8x96xf32> to vector<8x4xf32>
    %cst_26 = arith.constant dense<0.000000e+00> : vector<8x8xf32>
    %41 = tpu.matmul %38, %39, %cst_26 {dimension_numbers = #tpu.dot_dimension_numbers<[1], [1], [0], [0], [0, 0, 1, 0], [], []>} : vector<8x4xf32>, vector<8x4xf32>, vector<8x8xf32> -> vector<8x8xf32>
    %cst_27 = arith.constant dense<0xFF800000> : vector<8xf32>
    %42 = vector.multi_reduction <maximumf>, %41, %cst_27 [1] : vector<8x8xf32> to vector<8xf32>
    %43 = vector.shape_cast %42 : vector<8xf32> to vector<8x1xf32>
    %44 = vector.broadcast %43 : vector<8x1xf32> to vector<8x8xf32>
    %45 = arith.subf %41, %44 : vector<8x8xf32>
    %46 = math.exp %45 : vector<8x8xf32>
    %cst_28 = arith.constant dense<0.000000e+00> : vector<8xf32>
    %47 = vector.multi_reduction <add>, %46, %cst_28 [1] : vector<8x8xf32> to vector<8xf32>
    %48 = vector.shape_cast %47 : vector<8xf32> to vector<8x1xf32>
    %49 = tpu.reciprocal %48 {approx = true} : vector<8x1xf32> -> vector<8x1xf32>
    %50 = vector.broadcast %49 : vector<8x1xf32> to vector<8x8xf32>
    %51 = arith.mulf %46, %50 : vector<8x8xf32>
    %cst_29 = arith.constant dense<0.000000e+00> : vector<8x4xf32>
    %52 = tpu.matmul %51, %40, %cst_29 {dimension_numbers = #tpu.dot_dimension_numbers<[1], [0], [0], [1], [0, 0, 1, 1], [], []>} : vector<8x8xf32>, vector<8x4xf32>, vector<8x4xf32> -> vector<8x4xf32>
    %c0_30 = arith.constant 0 : index
    %c0_31 = arith.constant 0 : index
    %53 = vector.load %arg15[%c0_30, %c0_31] : memref<8x32xf32, #tpu.memory_space<vmem>>, vector<8x4xf32>
    tpu.vector_store %arg15[%c0_30, %c0_31], %52 {strides = array<i32>} : memref<8x32xf32, #tpu.memory_space<vmem>>, vector<8x4xf32>,
    %54 = vector.extract_strided_slice %35 {offsets = [0, 4], sizes = [8, 4], strides = [1, 1]} : vector<8x96xf32> to vector<8x4xf32>
    %cst_32 = arith.constant 5.000000e-01 : f32
    %55 = vector.broadcast %cst_32 : f32 to vector<8x4xf32>
    %56 = arith.mulf %54, %55 : vector<8x4xf32>
    %57 = vector.extract_strided_slice %35 {offsets = [0, 36], sizes = [8, 4], strides = [1, 1]} : vector<8x96xf32> to vector<8x4xf32>
    %58 = vector.extract_strided_slice %35 {offsets = [0, 68], sizes = [8, 4], strides = [1, 1]} : vector<8x96xf32> to vector<8x4xf32>
    %cst_33 = arith.constant dense<0.000000e+00> : vector<8x8xf32>
    %59 = tpu.matmul %56, %57, %cst_33 {dimension_numbers = #tpu.dot_dimension_numbers<[1], [1], [0], [0], [0, 0, 1, 0], [], []>} : vector<8x4xf32>, vector<8x4xf32>, vector<8x8xf32> -> vector<8x8xf32>
    %cst_34 = arith.constant dense<0xFF800000> : vector<8xf32>
    %60 = vector.multi_reduction <maximumf>, %59, %cst_34 [1] : vector<8x8xf32> to vector<8xf32>
    %61 = vector.shape_cast %60 : vector<8xf32> to vector<8x1xf32>
    %62 = vector.broadcast %61 : vector<8x1xf32> to vector<8x8xf32>
    %63 = arith.subf %59, %62 : vector<8x8xf32>
    %64 = math.exp %63 : vector<8x8xf32>
    %cst_35 = arith.constant dense<0.000000e+00> : vector<8xf32>
    %65 = vector.multi_reduction <add>, %64, %cst_35 [1] : vector<8x8xf32> to vector<8xf32>
    %66 = vector.shape_cast %65 : vector<8xf32> to vector<8x1xf32>
    %67 = tpu.reciprocal %66 {approx = true} : vector<8x1xf32> -> vector<8x1xf32>
    %68 = vector.broadcast %67 : vector<8x1xf32> to vector<8x8xf32>
    %69 = arith.mulf %64, %68 : vector<8x8xf32>
    %cst_36 = arith.constant dense<0.000000e+00> : vector<8x4xf32>
    %70 = tpu.matmul %69, %58, %cst_36 {dimension_numbers = #tpu.dot_dimension_numbers<[1], [0], [0], [1], [0, 0, 1, 1], [], []>} : vector<8x8xf32>, vector<8x4xf32>, vector<8x4xf32> -> vector<8x4xf32>
    %c0_37 = arith.constant 0 : index
    %c4 = arith.constant 4 : index
    %71 = vector.load %arg15[%c0_37, %c4] : memref<8x32xf32, #tpu.memory_space<vmem>>, vector<8x4xf32>
    tpu.vector_store %arg15[%c0_37, %c4], %70 {strides = array<i32>} : memref<8x32xf32, #tpu.memory_space<vmem>>, vector<8x4xf32>,
    %72 = vector.extract_strided_slice %35 {offsets = [0, 8], sizes = [8, 4], strides = [1, 1]} : vector<8x96xf32> to vector<8x4xf32>
    %cst_38 = arith.constant 5.000000e-01 : f32
    %73 = vector.broadcast %cst_38 : f32 to vector<8x4xf32>
    %74 = arith.mulf %72, %73 : vector<8x4xf32>
    %75 = vector.extract_strided_slice %35 {offsets = [0, 40], sizes = [8, 4], strides = [1, 1]} : vector<8x96xf32> to vector<8x4xf32>
    %76 = vector.extract_strided_slice %35 {offsets = [0, 72], sizes = [8, 4], strides = [1, 1]} : vector<8x96xf32> to vector<8x4xf32>
    %cst_39 = arith.constant dense<0.000000e+00> : vector<8x8xf32>
    %77 = tpu.matmul %74, %75, %cst_39 {dimension_numbers = #tpu.dot_dimension_numbers<[1], [1], [0], [0], [0, 0, 1, 0], [], []>} : vector<8x4xf32>, vector<8x4xf32>, vector<8x8xf32> -> vector<8x8xf32>
    %cst_40 = arith.constant dense<0xFF800000> : vector<8xf32>
    %78 = vector.multi_reduction <maximumf>, %77, %cst_40 [1] : vector<8x8xf32> to vector<8xf32>
    %79 = vector.shape_cast %78 : vector<8xf32> to vector<8x1xf32>
    %80 = vector.broadcast %79 : vector<8x1xf32> to vector<8x8xf32>
    %81 = arith.subf %77, %80 : vector<8x8xf32>
    %82 = math.exp %81 : vector<8x8xf32>
    %cst_41 = arith.constant dense<0.000000e+00> : vector<8xf32>
    %83 = vector.multi_reduction <add>, %82, %cst_41 [1] : vector<8x8xf32> to vector<8xf32>
    %84 = vector.shape_cast %83 : vector<8xf32> to vector<8x1xf32>
    %85 = tpu.reciprocal %84 {approx = true} : vector<8x1xf32> -> vector<8x1xf32>
    %86 = vector.broadcast %85 : vector<8x1xf32> to vector<8x8xf32>
    %87 = arith.mulf %82, %86 : vector<8x8xf32>
    %cst_42 = arith.constant dense<0.000000e+00> : vector<8x4xf32>
    %88 = tpu.matmul %87, %76, %cst_42 {dimension_numbers = #tpu.dot_dimension_numbers<[1], [0], [0], [1], [0, 0, 1, 1], [], []>} : vector<8x8xf32>, vector<8x4xf32>, vector<8x4xf32> -> vector<8x4xf32>
    %c0_43 = arith.constant 0 : index
    %c8 = arith.constant 8 : index
    %89 = vector.load %arg15[%c0_43, %c8] : memref<8x32xf32, #tpu.memory_space<vmem>>, vector<8x4xf32>
    tpu.vector_store %arg15[%c0_43, %c8], %88 {strides = array<i32>} : memref<8x32xf32, #tpu.memory_space<vmem>>, vector<8x4xf32>,
    %90 = vector.extract_strided_slice %35 {offsets = [0, 12], sizes = [8, 4], strides = [1, 1]} : vector<8x96xf32> to vector<8x4xf32>
    %cst_44 = arith.constant 5.000000e-01 : f32
    %91 = vector.broadcast %cst_44 : f32 to vector<8x4xf32>
    %92 = arith.mulf %90, %91 : vector<8x4xf32>
    %93 = vector.extract_strided_slice %35 {offsets = [0, 44], sizes = [8, 4], strides = [1, 1]} : vector<8x96xf32> to vector<8x4xf32>
    %94 = vector.extract_strided_slice %35 {offsets = [0, 76], sizes = [8, 4], strides = [1, 1]} : vector<8x96xf32> to vector<8x4xf32>
    %cst_45 = arith.constant dense<0.000000e+00> : vector<8x8xf32>
    %95 = tpu.matmul %92, %93, %cst_45 {dimension_numbers = #tpu.dot_dimension_numbers<[1], [1], [0], [0], [0, 0, 1, 0], [], []>} : vector<8x4xf32>, vector<8x4xf32>, vector<8x8xf32> -> vector<8x8xf32>
    %cst_46 = arith.constant dense<0xFF800000> : vector<8xf32>
    %96 = vector.multi_reduction <maximumf>, %95, %cst_46 [1] : vector<8x8xf32> to vector<8xf32>
    %97 = vector.shape_cast %96 : vector<8xf32> to vector<8x1xf32>
    %98 = vector.broadcast %97 : vector<8x1xf32> to vector<8x8xf32>
    %99 = arith.subf %95, %98 : vector<8x8xf32>
    %100 = math.exp %99 : vector<8x8xf32>
    %cst_47 = arith.constant dense<0.000000e+00> : vector<8xf32>
    %101 = vector.multi_reduction <add>, %100, %cst_47 [1] : vector<8x8xf32> to vector<8xf32>
    %102 = vector.shape_cast %101 : vector<8xf32> to vector<8x1xf32>
    %103 = tpu.reciprocal %102 {approx = true} : vector<8x1xf32> -> vector<8x1xf32>
    %104 = vector.broadcast %103 : vector<8x1xf32> to vector<8x8xf32>
    %105 = arith.mulf %100, %104 : vector<8x8xf32>
    %cst_48 = arith.constant dense<0.000000e+00> : vector<8x4xf32>
    %106 = tpu.matmul %105, %94, %cst_48 {dimension_numbers = #tpu.dot_dimension_numbers<[1], [0], [0], [1], [0, 0, 1, 1], [], []>} : vector<8x8xf32>, vector<8x4xf32>, vector<8x4xf32> -> vector<8x4xf32>
    %c0_49 = arith.constant 0 : index
    %c12 = arith.constant 12 : index
    %107 = vector.load %arg15[%c0_49, %c12] : memref<8x32xf32, #tpu.memory_space<vmem>>, vector<8x4xf32>
    tpu.vector_store %arg15[%c0_49, %c12], %106 {strides = array<i32>} : memref<8x32xf32, #tpu.memory_space<vmem>>, vector<8x4xf32>,
    %108 = vector.extract_strided_slice %35 {offsets = [0, 16], sizes = [8, 4], strides = [1, 1]} : vector<8x96xf32> to vector<8x4xf32>
    %cst_50 = arith.constant 5.000000e-01 : f32
    %109 = vector.broadcast %cst_50 : f32 to vector<8x4xf32>
    %110 = arith.mulf %108, %109 : vector<8x4xf32>
    %111 = vector.extract_strided_slice %35 {offsets = [0, 48], sizes = [8, 4], strides = [1, 1]} : vector<8x96xf32> to vector<8x4xf32>
    %112 = vector.extract_strided_slice %35 {offsets = [0, 80], sizes = [8, 4], strides = [1, 1]} : vector<8x96xf32> to vector<8x4xf32>
    %cst_51 = arith.constant dense<0.000000e+00> : vector<8x8xf32>
    %113 = tpu.matmul %110, %111, %cst_51 {dimension_numbers = #tpu.dot_dimension_numbers<[1], [1], [0], [0], [0, 0, 1, 0], [], []>} : vector<8x4xf32>, vector<8x4xf32>, vector<8x8xf32> -> vector<8x8xf32>
    %cst_52 = arith.constant dense<0xFF800000> : vector<8xf32>
    %114 = vector.multi_reduction <maximumf>, %113, %cst_52 [1] : vector<8x8xf32> to vector<8xf32>
    %115 = vector.shape_cast %114 : vector<8xf32> to vector<8x1xf32>
    %116 = vector.broadcast %115 : vector<8x1xf32> to vector<8x8xf32>
    %117 = arith.subf %113, %116 : vector<8x8xf32>
    %118 = math.exp %117 : vector<8x8xf32>
    %cst_53 = arith.constant dense<0.000000e+00> : vector<8xf32>
    %119 = vector.multi_reduction <add>, %118, %cst_53 [1] : vector<8x8xf32> to vector<8xf32>
    %120 = vector.shape_cast %119 : vector<8xf32> to vector<8x1xf32>
    %121 = tpu.reciprocal %120 {approx = true} : vector<8x1xf32> -> vector<8x1xf32>
    %122 = vector.broadcast %121 : vector<8x1xf32> to vector<8x8xf32>
    %123 = arith.mulf %118, %122 : vector<8x8xf32>
    %cst_54 = arith.constant dense<0.000000e+00> : vector<8x4xf32>
    %124 = tpu.matmul %123, %112, %cst_54 {dimension_numbers = #tpu.dot_dimension_numbers<[1], [0], [0], [1], [0, 0, 1, 1], [], []>} : vector<8x8xf32>, vector<8x4xf32>, vector<8x4xf32> -> vector<8x4xf32>
    %c0_55 = arith.constant 0 : index
    %c16 = arith.constant 16 : index
    %125 = vector.load %arg15[%c0_55, %c16] : memref<8x32xf32, #tpu.memory_space<vmem>>, vector<8x4xf32>
    tpu.vector_store %arg15[%c0_55, %c16], %124 {strides = array<i32>} : memref<8x32xf32, #tpu.memory_space<vmem>>, vector<8x4xf32>,
    %126 = vector.extract_strided_slice %35 {offsets = [0, 20], sizes = [8, 4], strides = [1, 1]} : vector<8x96xf32> to vector<8x4xf32>
    %cst_56 = arith.constant 5.000000e-01 : f32
    %127 = vector.broadcast %cst_56 : f32 to vector<8x4xf32>
    %128 = arith.mulf %126, %127 : vector<8x4xf32>
    %129 = vector.extract_strided_slice %35 {offsets = [0, 52], sizes = [8, 4], strides = [1, 1]} : vector<8x96xf32> to vector<8x4xf32>
    %130 = vector.extract_strided_slice %35 {offsets = [0, 84], sizes = [8, 4], strides = [1, 1]} : vector<8x96xf32> to vector<8x4xf32>
    %cst_57 = arith.constant dense<0.000000e+00> : vector<8x8xf32>
    %131 = tpu.matmul %128, %129, %cst_57 {dimension_numbers = #tpu.dot_dimension_numbers<[1], [1], [0], [0], [0, 0, 1, 0], [], []>} : vector<8x4xf32>, vector<8x4xf32>, vector<8x8xf32> -> vector<8x8xf32>
    %cst_58 = arith.constant dense<0xFF800000> : vector<8xf32>
    %132 = vector.multi_reduction <maximumf>, %131, %cst_58 [1] : vector<8x8xf32> to vector<8xf32>
    %133 = vector.shape_cast %132 : vector<8xf32> to vector<8x1xf32>
    %134 = vector.broadcast %133 : vector<8x1xf32> to vector<8x8xf32>
    %135 = arith.subf %131, %134 : vector<8x8xf32>
    %136 = math.exp %135 : vector<8x8xf32>
    %cst_59 = arith.constant dense<0.000000e+00> : vector<8xf32>
    %137 = vector.multi_reduction <add>, %136, %cst_59 [1] : vector<8x8xf32> to vector<8xf32>
    %138 = vector.shape_cast %137 : vector<8xf32> to vector<8x1xf32>
    %139 = tpu.reciprocal %138 {approx = true} : vector<8x1xf32> -> vector<8x1xf32>
    %140 = vector.broadcast %139 : vector<8x1xf32> to vector<8x8xf32>
    %141 = arith.mulf %136, %140 : vector<8x8xf32>
    %cst_60 = arith.constant dense<0.000000e+00> : vector<8x4xf32>
    %142 = tpu.matmul %141, %130, %cst_60 {dimension_numbers = #tpu.dot_dimension_numbers<[1], [0], [0], [1], [0, 0, 1, 1], [], []>} : vector<8x8xf32>, vector<8x4xf32>, vector<8x4xf32> -> vector<8x4xf32>
    %c0_61 = arith.constant 0 : index
    %c20 = arith.constant 20 : index
    %143 = vector.load %arg15[%c0_61, %c20] : memref<8x32xf32, #tpu.memory_space<vmem>>, vector<8x4xf32>
    tpu.vector_store %arg15[%c0_61, %c20], %142 {strides = array<i32>} : memref<8x32xf32, #tpu.memory_space<vmem>>, vector<8x4xf32>,
    %144 = vector.extract_strided_slice %35 {offsets = [0, 24], sizes = [8, 4], strides = [1, 1]} : vector<8x96xf32> to vector<8x4xf32>
    %cst_62 = arith.constant 5.000000e-01 : f32
    %145 = vector.broadcast %cst_62 : f32 to vector<8x4xf32>
    %146 = arith.mulf %144, %145 : vector<8x4xf32>
    %147 = vector.extract_strided_slice %35 {offsets = [0, 56], sizes = [8, 4], strides = [1, 1]} : vector<8x96xf32> to vector<8x4xf32>
    %148 = vector.extract_strided_slice %35 {offsets = [0, 88], sizes = [8, 4], strides = [1, 1]} : vector<8x96xf32> to vector<8x4xf32>
    %cst_63 = arith.constant dense<0.000000e+00> : vector<8x8xf32>
    %149 = tpu.matmul %146, %147, %cst_63 {dimension_numbers = #tpu.dot_dimension_numbers<[1], [1], [0], [0], [0, 0, 1, 0], [], []>} : vector<8x4xf32>, vector<8x4xf32>, vector<8x8xf32> -> vector<8x8xf32>
    %cst_64 = arith.constant dense<0xFF800000> : vector<8xf32>
    %150 = vector.multi_reduction <maximumf>, %149, %cst_64 [1] : vector<8x8xf32> to vector<8xf32>
    %151 = vector.shape_cast %150 : vector<8xf32> to vector<8x1xf32>
    %152 = vector.broadcast %151 : vector<8x1xf32> to vector<8x8xf32>
    %153 = arith.subf %149, %152 : vector<8x8xf32>
    %154 = math.exp %153 : vector<8x8xf32>
    %cst_65 = arith.constant dense<0.000000e+00> : vector<8xf32>
    %155 = vector.multi_reduction <add>, %154, %cst_65 [1] : vector<8x8xf32> to vector<8xf32>
    %156 = vector.shape_cast %155 : vector<8xf32> to vector<8x1xf32>
    %157 = tpu.reciprocal %156 {approx = true} : vector<8x1xf32> -> vector<8x1xf32>
    %158 = vector.broadcast %157 : vector<8x1xf32> to vector<8x8xf32>
    %159 = arith.mulf %154, %158 : vector<8x8xf32>
    %cst_66 = arith.constant dense<0.000000e+00> : vector<8x4xf32>
    %160 = tpu.matmul %159, %148, %cst_66 {dimension_numbers = #tpu.dot_dimension_numbers<[1], [0], [0], [1], [0, 0, 1, 1], [], []>} : vector<8x8xf32>, vector<8x4xf32>, vector<8x4xf32> -> vector<8x4xf32>
    %c0_67 = arith.constant 0 : index
    %c24 = arith.constant 24 : index
    %161 = vector.load %arg15[%c0_67, %c24] : memref<8x32xf32, #tpu.memory_space<vmem>>, vector<8x4xf32>
    tpu.vector_store %arg15[%c0_67, %c24], %160 {strides = array<i32>} : memref<8x32xf32, #tpu.memory_space<vmem>>, vector<8x4xf32>,
    %162 = vector.extract_strided_slice %35 {offsets = [0, 28], sizes = [8, 4], strides = [1, 1]} : vector<8x96xf32> to vector<8x4xf32>
    %cst_68 = arith.constant 5.000000e-01 : f32
    %163 = vector.broadcast %cst_68 : f32 to vector<8x4xf32>
    %164 = arith.mulf %162, %163 : vector<8x4xf32>
    %165 = vector.extract_strided_slice %35 {offsets = [0, 60], sizes = [8, 4], strides = [1, 1]} : vector<8x96xf32> to vector<8x4xf32>
    %166 = vector.extract_strided_slice %35 {offsets = [0, 92], sizes = [8, 4], strides = [1, 1]} : vector<8x96xf32> to vector<8x4xf32>
    %cst_69 = arith.constant dense<0.000000e+00> : vector<8x8xf32>
    %167 = tpu.matmul %164, %165, %cst_69 {dimension_numbers = #tpu.dot_dimension_numbers<[1], [1], [0], [0], [0, 0, 1, 0], [], []>} : vector<8x4xf32>, vector<8x4xf32>, vector<8x8xf32> -> vector<8x8xf32>
    %cst_70 = arith.constant dense<0xFF800000> : vector<8xf32>
    %168 = vector.multi_reduction <maximumf>, %167, %cst_70 [1] : vector<8x8xf32> to vector<8xf32>
    %169 = vector.shape_cast %168 : vector<8xf32> to vector<8x1xf32>
    %170 = vector.broadcast %169 : vector<8x1xf32> to vector<8x8xf32>
    %171 = arith.subf %167, %170 : vector<8x8xf32>
    %172 = math.exp %171 : vector<8x8xf32>
    %cst_71 = arith.constant dense<0.000000e+00> : vector<8xf32>
    %173 = vector.multi_reduction <add>, %172, %cst_71 [1] : vector<8x8xf32> to vector<8xf32>
    %174 = vector.shape_cast %173 : vector<8xf32> to vector<8x1xf32>
    %175 = tpu.reciprocal %174 {approx = true} : vector<8x1xf32> -> vector<8x1xf32>
    %176 = vector.broadcast %175 : vector<8x1xf32> to vector<8x8xf32>
    %177 = arith.mulf %172, %176 : vector<8x8xf32>
    %cst_72 = arith.constant dense<0.000000e+00> : vector<8x4xf32>
    %178 = tpu.matmul %177, %166, %cst_72 {dimension_numbers = #tpu.dot_dimension_numbers<[1], [0], [0], [1], [0, 0, 1, 1], [], []>} : vector<8x8xf32>, vector<8x4xf32>, vector<8x4xf32> -> vector<8x4xf32>
    %c0_73 = arith.constant 0 : index
    %c28 = arith.constant 28 : index
    %179 = vector.load %arg15[%c0_73, %c28] : memref<8x32xf32, #tpu.memory_space<vmem>>, vector<8x4xf32>
    tpu.vector_store %arg15[%c0_73, %c28], %178 {strides = array<i32>} : memref<8x32xf32, #tpu.memory_space<vmem>>, vector<8x4xf32>,
    %c0_74 = arith.constant 0 : index
    %c0_75 = arith.constant 0 : index
    %180 = vector.load %arg15[%c0_74, %c0_75] : memref<8x32xf32, #tpu.memory_space<vmem>>, vector<8x32xf32>
    %c0_76 = arith.constant 0 : index
    %c0_77 = arith.constant 0 : index
    %181 = vector.load %arg6[%c0_76, %c0_77] : memref<32x32xf32, #tpu.memory_space<vmem>>, vector<32x32xf32>
    %cst_78 = arith.constant dense<0.000000e+00> : vector<8x32xf32>
    %182 = tpu.matmul %180, %181, %cst_78 {dimension_numbers = #tpu.dot_dimension_numbers<[1], [0], [0], [1], [0, 0, 1, 1], [], []>} : vector<8x32xf32>, vector<32x32xf32>, vector<8x32xf32> -> vector<8x32xf32>
    %183 = vector.broadcast %7 : vector<1x32xf32> to vector<8x32xf32>
    %184 = arith.addf %182, %183 : vector<8x32xf32>
    %185 = arith.addf %1, %184 : vector<8x32xf32>
    %cst_79 = arith.constant dense<0.000000e+00> : vector<8xf32>
    %186 = vector.multi_reduction <add>, %185, %cst_79 [1] : vector<8x32xf32> to vector<8xf32>
    %187 = vector.shape_cast %186 : vector<8xf32> to vector<8x1xf32>
    %cst_80 = arith.constant 3.200000e+01 : f32
    %188 = vector.broadcast %cst_80 : f32 to vector<8x1xf32>
    %189 = arith.divf %187, %188 : vector<8x1xf32>
    %190 = vector.broadcast %189 : vector<8x1xf32> to vector<8x32xf32>
    %191 = arith.subf %185, %190 : vector<8x32xf32>
    %192 = arith.mulf %191, %191 : vector<8x32xf32>
    %cst_81 = arith.constant dense<0.000000e+00> : vector<8xf32>
    %193 = vector.multi_reduction <add>, %192, %cst_81 [1] : vector<8x32xf32> to vector<8xf32>
    %194 = vector.shape_cast %193 : vector<8xf32> to vector<8x1xf32>
    %cst_82 = arith.constant 3.200000e+01 : f32
    %195 = vector.broadcast %cst_82 : f32 to vector<8x1xf32>
    %196 = arith.divf %194, %195 : vector<8x1xf32>
    %197 = vector.broadcast %189 : vector<8x1xf32> to vector<8x32xf32>
    %198 = arith.subf %185, %197 : vector<8x32xf32>
    %cst_83 = arith.constant 9.99999974E-6 : f32
    %199 = vector.broadcast %cst_83 : f32 to vector<8x1xf32>
    %200 = arith.addf %196, %199 : vector<8x1xf32>
    %201 = math.rsqrt %200 : vector<8x1xf32>
    %202 = vector.broadcast %201 : vector<8x1xf32> to vector<8x32xf32>
    %203 = arith.mulf %198, %202 : vector<8x32xf32>
    %204 = vector.broadcast %4 : vector<1x32xf32> to vector<8x32xf32>
    %205 = arith.mulf %203, %204 : vector<8x32xf32>
    %206 = vector.broadcast %5 : vector<1x32xf32> to vector<8x32xf32>
    %207 = arith.addf %205, %206 : vector<8x32xf32>
    %c0_84 = arith.constant 0 : index
    %c0_85 = arith.constant 0 : index
    %208 = vector.load %arg10[%c0_84, %c0_85] : memref<32x128xf32, #tpu.memory_space<vmem>>, vector<32x128xf32>
    %cst_86 = arith.constant dense<0.000000e+00> : vector<8x128xf32>
    %209 = tpu.matmul %207, %208, %cst_86 {dimension_numbers = #tpu.dot_dimension_numbers<[1], [0], [0], [1], [0, 0, 1, 1], [], []>} : vector<8x32xf32>, vector<32x128xf32>, vector<8x128xf32> -> vector<8x128xf32>
    %210 = vector.broadcast %8 : vector<1x128xf32> to vector<8x128xf32>
    %211 = arith.addf %209, %210 : vector<8x128xf32>
    %cst_87 = arith.constant 5.000000e-01 : f32
    %212 = vector.broadcast %cst_87 : f32 to vector<8x128xf32>
    %213 = arith.mulf %212, %211 : vector<8x128xf32>
    %cst_88 = arith.constant 4.471500e-02 : f32
    %214 = vector.broadcast %cst_88 : f32 to vector<8x128xf32>
    %215 = arith.mulf %214, %211 : vector<8x128xf32>
    %216 = arith.mulf %215, %211 : vector<8x128xf32>
    %217 = arith.mulf %216, %211 : vector<8x128xf32>
    %218 = arith.addf %211, %217 : vector<8x128xf32>
    %cst_89 = arith.constant 0.797884583 : f32
    %219 = vector.broadcast %cst_89 : f32 to vector<8x128xf32>
    %220 = arith.mulf %219, %218 : vector<8x128xf32>
    %221 = math.tanh %220 : vector<8x128xf32>
    %cst_90 = arith.constant 1.000000e+00 : f32
    %222 = vector.broadcast %cst_90 : f32 to vector<8x128xf32>
    %223 = arith.addf %222, %221 : vector<8x128xf32>
    %224 = arith.mulf %213, %223 : vector<8x128xf32>
    %c0_91 = arith.constant 0 : index
    %c0_92 = arith.constant 0 : index
    %225 = vector.load %arg12[%c0_91, %c0_92] : memref<128x32xf32, #tpu.memory_space<vmem>>, vector<128x32xf32>
    %cst_93 = arith.constant dense<0.000000e+00> : vector<8x32xf32>
    %226 = tpu.matmul %224, %225, %cst_93 {dimension_numbers = #tpu.dot_dimension_numbers<[1], [0], [0], [1], [0, 0, 1, 1], [], []>} : vector<8x128xf32>, vector<128x32xf32>, vector<8x32xf32> -> vector<8x32xf32>
    %227 = vector.broadcast %9 : vector<1x32xf32> to vector<8x32xf32>
    %228 = arith.addf %226, %227 : vector<8x32xf32>
    %cst_94 = arith.constant 5.000000e-01 : f32
    %229 = vector.broadcast %cst_94 : f32 to vector<8x32xf32>
    %230 = arith.mulf %229, %228 : vector<8x32xf32>
    %cst_95 = arith.constant 4.471500e-02 : f32
    %231 = vector.broadcast %cst_95 : f32 to vector<8x32xf32>
    %232 = arith.mulf %231, %228 : vector<8x32xf32>
    %233 = arith.mulf %232, %228 : vector<8x32xf32>
    %234 = arith.mulf %233, %228 : vector<8x32xf32>
    %235 = arith.addf %228, %234 : vector<8x32xf32>
    %cst_96 = arith.constant 0.797884583 : f32
    %236 = vector.broadcast %cst_96 : f32 to vector<8x32xf32>
    %237 = arith.mulf %236, %235 : vector<8x32xf32>
    %238 = math.tanh %237 : vector<8x32xf32>
    %cst_97 = arith.constant 1.000000e+00 : f32
    %239 = vector.broadcast %cst_97 : f32 to vector<8x32xf32>
    %240 = arith.addf %239, %238 : vector<8x32xf32>
    %241 = arith.mulf %230, %240 : vector<8x32xf32>
    %242 = arith.addf %185, %241 : vector<8x32xf32>
    %c0_98 = arith.constant 0 : index
    %c0_99 = arith.constant 0 : index
    %c0_100 = arith.constant 0 : index
    %243 = vector.load %arg14[%c0_98, %c0_99, %c0_100] : memref<1x8x32xf32, #tpu.memory_space<vmem>>, vector<1x8x32xf32>
    %244 = vector.shape_cast %243 : vector<1x8x32xf32> to vector<8x32xf32>
    %245 = vector.shape_cast %242 : vector<8x32xf32> to vector<1x8x32xf32>
    tpu.vector_store %arg14[%c0_98, %c0_99, %c0_100], %245 {strides = array<i32>} : memref<1x8x32xf32, #tpu.memory_space<vmem>>, vector<1x8x32xf32>,
    return
  }
  func.func @transform_0(%arg0: i32) -> (i32, i32, i32) {
    %c0_i32 = arith.constant 0 : i32
    %c0_i32_0 = arith.constant 0 : i32
    %c0_i32_1 = arith.constant 0 : i32
    return %arg0, %c0_i32, %c0_i32_0 : i32, i32, i32
  }
  func.func @transform_1(%arg0: i32) -> (i32, i32) {
    %c0_i32 = arith.constant 0 : i32
    %c0_i32_0 = arith.constant 0 : i32
    %c0_i32_1 = arith.constant 0 : i32
    return %c0_i32, %c0_i32_0 : i32, i32
  }
  func.func @transform_2(%arg0: i32) -> (i32, i32) {
    %c0_i32 = arith.constant 0 : i32
    %c0_i32_0 = arith.constant 0 : i32
    %c0_i32_1 = arith.constant 0 : i32
    return %c0_i32, %c0_i32_0 : i32, i32
  }
  func.func @transform_3(%arg0: i32) -> (i32, i32) {
    %c0_i32 = arith.constant 0 : i32
    %c0_i32_0 = arith.constant 0 : i32
    %c0_i32_1 = arith.constant 0 : i32
    return %c0_i32, %c0_i32_0 : i32, i32
  }
  func.func @transform_4(%arg0: i32) -> (i32, i32) {
    %c0_i32 = arith.constant 0 : i32
    %c0_i32_0 = arith.constant 0 : i32
    %c0_i32_1 = arith.constant 0 : i32
    return %c0_i32, %c0_i32_0 : i32, i32
  }
  func.func @transform_5(%arg0: i32) -> (i32, i32) {
    %c0_i32 = arith.constant 0 : i32
    %c0_i32_0 = arith.constant 0 : i32
    %c0_i32_1 = arith.constant 0 : i32
    return %c0_i32, %c0_i32_0 : i32, i32
  }
  func.func @transform_6(%arg0: i32) -> (i32, i32) {
    %c0_i32 = arith.constant 0 : i32
    %c0_i32_0 = arith.constant 0 : i32
    %c0_i32_1 = arith.constant 0 : i32
    return %c0_i32, %c0_i32_0 : i32, i32
  }
  func.func @transform_7(%arg0: i32) -> (i32, i32) {
    %c0_i32 = arith.constant 0 : i32
    %c0_i32_0 = arith.constant 0 : i32
    %c0_i32_1 = arith.constant 0 : i32
    return %c0_i32, %c0_i32_0 : i32, i32
  }
  func.func @transform_8(%arg0: i32) -> (i32, i32) {
    %c0_i32 = arith.constant 0 : i32
    %c0_i32_0 = arith.constant 0 : i32
    %c0_i32_1 = arith.constant 0 : i32
    return %c0_i32, %c0_i32_0 : i32, i32
  }
  func.func @transform_9(%arg0: i32) -> (i32, i32) {
    %c0_i32 = arith.constant 0 : i32
    %c0_i32_0 = arith.constant 0 : i32
    %c0_i32_1 = arith.constant 0 : i32
    return %c0_i32, %c0_i32_0 : i32, i32
  }
  func.func @transform_10(%arg0: i32) -> (i32, i32) {
    %c0_i32 = arith.constant 0 : i32
    %c0_i32_0 = arith.constant 0 : i32
    %c0_i32_1 = arith.constant 0 : i32
    return %c0_i32, %c0_i32_0 : i32, i32
  }
  func.func @transform_11(%arg0: i32) -> (i32, i32) {
    %c0_i32 = arith.constant 0 : i32
    %c0_i32_0 = arith.constant 0 : i32
    %c0_i32_1 = arith.constant 0 : i32
    return %c0_i32, %c0_i32_0 : i32, i32
  }
  func.func @transform_12(%arg0: i32) -> (i32, i32) {
    %c0_i32 = arith.constant 0 : i32
    %c0_i32_0 = arith.constant 0 : i32
    %c0_i32_1 = arith.constant 0 : i32
    return %c0_i32, %c0_i32_0 : i32, i32
  }
  func.func @transform_13(%arg0: i32) -> (i32, i32, i32) {
    %c0_i32 = arith.constant 0 : i32
    %c0_i32_0 = arith.constant 0 : i32
    %c0_i32_1 = arith.constant 0 : i32
    return %arg0, %c0_i32, %c0_i32_0 : i32, i32, i32
  }
}

</mosaic_0001>

<llo_original>
// kernel: tpu_custom_call.1
$region0: #{tpu_custom_call.1}
  #allocation0 [shape = 'u32[]', space=smem, size = 0x4, offset = 0x4, fixed_abs, tag = 'smem constant byte address 0x4 - core index']
  #allocation1 [shape = 'u32[72,128]{1,0:T(1,128)}', space=vmem, size = 0x9000, scoped, tag = 'internal scratch']
  #allocation2 [shape = 'f32[8,32]{1,0:T(8,128)}', space=vmem, size = 0x1000, scoped, tag = 'scratch operand']
  %s0 = inlined_call_operand.vmem [shape: f32[2,8,32], index: 0, kind: input, shape index: {}]
  %s1 = inlined_call_operand.vmem [shape: f32[1,32], index: 1, kind: input, shape index: {}]
  %s2 = inlined_call_operand.vmem [shape: f32[1,32], index: 2, kind: input, shape index: {}]
  %s3 = inlined_call_operand.vmem [shape: f32[32,96], index: 3, kind: input, shape index: {}]
  %s4 = inlined_call_operand.vmem [shape: f32[1,96], index: 4, kind: input, shape index: {}]
  %s5 = inlined_call_operand.vmem [shape: f32[32,32], index: 5, kind: input, shape index: {}]
  %s6 = inlined_call_operand.vmem [shape: f32[1,32], index: 6, kind: input, shape index: {}]
  %s7 = inlined_call_operand.vmem [shape: f32[1,32], index: 7, kind: input, shape index: {}]
  %s8 = inlined_call_operand.vmem [shape: f32[1,32], index: 8, kind: input, shape index: {}]
  %s9 = inlined_call_operand.vmem [shape: f32[32,128], index: 9, kind: input, shape index: {}]
  %s10 = inlined_call_operand.vmem [shape: f32[1,128], index: 10, kind: input, shape index: {}]
  %s11 = inlined_call_operand.vmem [shape: f32[128,32], index: 11, kind: input, shape index: {}]
  %s12 = inlined_call_operand.vmem [shape: f32[1,32], index: 12, kind: input, shape index: {}]
  %s13 = inlined_call_operand.hbm [shape: f32[2,8,32], index: 13, kind: output, shape index: {}]
  %s14 = sld [smem:[#allocation0]]
  $region85: #{tpu_custom_call.1} parent=0
    _
  %s16 = ssub.s32 1, %s14
  %s17 = scalar_select 0, %s16, %s14
  $region1: #{tpu_custom_call.1} parent=0
    #allocation3 [shape = 'u8[8192]{0}', space=vmem, size = 0x2000, scoped, tag = 'output window, operand 0']
    #allocation4 [shape = 's32[2]{0}', space=sflag, size = 0x8, scoped, tag = 'scoped memory for tpu_custom_call.1']
    %18 = vsyncpa [#allocation4], 0
    %s19 = scalar_lea.sflag [#allocation4], 1
    %20 = vsyncpa %s19, 0
    loop: start=0, step=1, limit=4
    $region2: #{tpu_custom_call.1} parent=1 // loop_pre_header
      _
    $region3: #{tpu_custom_call.1} parent=1 // loop_header
      %s22 = sphi 0, %s26
      %p23 = scmp.ge.s32.totalorder %s22, 4
      %s32 = sphi 0, %s34
      %s35 = sphi 0, %s32
      %s36 = sphi 0, %s35
      %s52 = sphi 0, %s36
      %s56 = sphi 0, %s56
      %s58 = sphi 0, %s56
      %s59 = sphi 0, %s58
      %s73 = sphi 0, %s59
      %s77 = sphi 0, %s77
      %s79 = sphi 0, %s77
      %s80 = sphi 0, %s79
      %s94 = sphi 0, %s80
      %s98 = sphi 0, %s98
      %s100 = sphi 0, %s98
      %s101 = sphi 0, %s100
      %s115 = sphi 0, %s101
      %s119 = sphi 0, %s119
      %s121 = sphi 0, %s119
      %s122 = sphi 0, %s121
      %s136 = sphi 0, %s122
      %s140 = sphi 0, %s140
      %s142 = sphi 0, %s140
      %s143 = sphi 0, %s142
      %s157 = sphi 0, %s143
      %s161 = sphi 0, %s161
      %s163 = sphi 0, %s161
      %s164 = sphi 0, %s163
      %s178 = sphi 0, %s164
      %s182 = sphi 0, %s182
      %s184 = sphi 0, %s182
      %s185 = sphi 0, %s184
      %s199 = sphi 0, %s185
      %s203 = sphi 0, %s203
      %s205 = sphi 0, %s203
      %s206 = sphi 0, %s205
      %s220 = sphi 0, %s206
      %s224 = sphi 0, %s224
      %s226 = sphi 0, %s224
      %s227 = sphi 0, %s226
      %s241 = sphi 0, %s227
      %s245 = sphi 0, %s245
      %s247 = sphi 0, %s245
      %s248 = sphi 0, %s247
      %s262 = sphi 0, %s248
      %s266 = sphi 0, %s266
      %s268 = sphi 0, %s266
      %s269 = sphi 0, %s268
      %s283 = sphi 0, %s269
      %s287 = sphi 0, %s287
      %s289 = sphi 0, %s287
      %s290 = sphi 0, %s289
      %s304 = sphi 0, %s290
      %s310 = sphi 0, %s312
      %s313 = sphi 0, %s310
      %s314 = sphi 0, %s313
      %s330 = sphi 0, %s314
    $region4: #{tpu_custom_call.1} parent=1 // loop_header_branch
      %25 = sbr.rel (%p23) target = $region8
    $region5: #{tpu_custom_call.1} parent=1 // loop_body
      %s27 = ssub.s32 %s22, 1
      %s28 = ssub.s32 %s22, 2
      %s29 = sadd.s32 %s22, 1
      %s30 = ssub.s32 %s22, %s29
      %p31 = scmp.eq.s32.totalorder %s30, 0
      %s33 = sadd.s32 %s32, 1
      %s34 = scalar_select %p31, %s32, %s33
      %p37 = pneg %p31
      %p38 = scmp.eq.s32.totalorder %s22, 1
      %p39 = por %p37, %p38
      %p40 = scmp.ne.s32.totalorder %s32, %s35
      %p41 = scmp.eq.s32.totalorder %s22, 0
      %p42 = por %p40, %p41
      %p43 = scmp.ne.s32.totalorder %s32, %s35
      %p44 = scmp.eq.s32.totalorder %s27, 1
      %p45 = por %p43, %p44
      %p46 = scmp.ne.s32.totalorder %s35, %s36
      %p47 = scmp.eq.s32.totalorder %s27, 0
      %p48 = por %p46, %p47
      %p49 = scmp.ne.s32.totalorder %s35, %s36
      %p50 = scmp.eq.s32.totalorder %s28, 1
      %p51 = por %p49, %p50
      %p53 = scmp.ne.s32.totalorder %s36, %s52
      %p54 = scmp.eq.s32.totalorder %s28, 0
      %p55 = por %p53, %p54
      %s57 = sadd.s32 %s56, 1
      %p60 = scmp.eq.s32.totalorder %s22, 1
      %p61 = scmp.ne.s32.totalorder %s56, %s58
      %p62 = scmp.eq.s32.totalorder %s22, 0
      %p63 = por %p61, %p62
      %p64 = scmp.ne.s32.totalorder %s56, %s58
      %p65 = scmp.eq.s32.totalorder %s27, 1
      %p66 = por %p64, %p65
      %p67 = scmp.ne.s32.totalorder %s58, %s59
      %p68 = scmp.eq.s32.totalorder %s27, 0
      %p69 = por %p67, %p68
      %p70 = scmp.ne.s32.totalorder %s58, %s59
      %p71 = scmp.eq.s32.totalorder %s28, 1
      %p72 = por %p70, %p71
      %p74 = scmp.ne.s32.totalorder %s59, %s73
      %p75 = scmp.eq.s32.totalorder %s28, 0
      %p76 = por %p74, %p75
      %s78 = sadd.s32 %s77, 1
      %p81 = scmp.eq.s32.totalorder %s22, 1
      %p82 = scmp.ne.s32.totalorder %s77, %s79
      %p83 = scmp.eq.s32.totalorder %s22, 0
      %p84 = por %p82, %p83
      %p85 = scmp.ne.s32.totalorder %s77, %s79
      %p86 = scmp.eq.s32.totalorder %s27, 1
      %p87 = por %p85, %p86
      %p88 = scmp.ne.s32.totalorder %s79, %s80
      %p89 = scmp.eq.s32.totalorder %s27, 0
      %p90 = por %p88, %p89
      %p91 = scmp.ne.s32.totalorder %s79, %s80
      %p92 = scmp.eq.s32.totalorder %s28, 1
      %p93 = por %p91, %p92
      %p95 = scmp.ne.s32.totalorder %s80, %s94
      %p96 = scmp.eq.s32.totalorder %s28, 0
      %p97 = por %p95, %p96
      %s99 = sadd.s32 %s98, 1
      %p102 = scmp.eq.s32.totalorder %s22, 1
      %p103 = scmp.ne.s32.totalorder %s98, %s100
      %p104 = scmp.eq.s32.totalorder %s22, 0
      %p105 = por %p103, %p104
      %p106 = scmp.ne.s32.totalorder %s98, %s100
      %p107 = scmp.eq.s32.totalorder %s27, 1
      %p108 = por %p106, %p107
      %p109 = scmp.ne.s32.totalorder %s100, %s101
      %p110 = scmp.eq.s32.totalorder %s27, 0
      %p111 = por %p109, %p110
      %p112 = scmp.ne.s32.totalorder %s100, %s101
      %p113 = scmp.eq.s32.totalorder %s28, 1
      %p114 = por %p112, %p113
      %p116 = scmp.ne.s32.totalorder %s101, %s115
      %p117 = scmp.eq.s32.totalorder %s28, 0
      %p118 = por %p116, %p117
      %s120 = sadd.s32 %s119, 1
      %p123 = scmp.eq.s32.totalorder %s22, 1
      %p124 = scmp.ne.s32.totalorder %s119, %s121
      %p125 = scmp.eq.s32.totalorder %s22, 0
      %p126 = por %p124, %p125
      %p127 = scmp.ne.s32.totalorder %s119, %s121
      %p128 = scmp.eq.s32.totalorder %s27, 1
      %p129 = por %p127, %p128
      %p130 = scmp.ne.s32.totalorder %s121, %s122
      %p131 = scmp.eq.s32.totalorder %s27, 0
      %p132 = por %p130, %p131
      %p133 = scmp.ne.s32.totalorder %s121, %s122
      %p134 = scmp.eq.s32.totalorder %s28, 1
      %p135 = por %p133, %p134
      %p137 = scmp.ne.s32.totalorder %s122, %s136
      %p138 = scmp.eq.s32.totalorder %s28, 0
      %p139 = por %p137, %p138
      %s141 = sadd.s32 %s140, 1
      %p144 = scmp.eq.s32.totalorder %s22, 1
      %p145 = scmp.ne.s32.totalorder %s140, %s142
      %p146 = scmp.eq.s32.totalorder %s22, 0
      %p147 = por %p145, %p146
      %p148 = scmp.ne.s32.totalorder %s140, %s142
      %p149 = scmp.eq.s32.totalorder %s27, 1
      %p150 = por %p148, %p149
      %p151 = scmp.ne.s32.totalorder %s142, %s143
      %p152 = scmp.eq.s32.totalorder %s27, 0
      %p153 = por %p151, %p152
      %p154 = scmp.ne.s32.totalorder %s142, %s143
      %p155 = scmp.eq.s32.totalorder %s28, 1
      %p156 = por %p154, %p155
      %p158 = scmp.ne.s32.totalorder %s143, %s157
      %p159 = scmp.eq.s32.totalorder %s28, 0
      %p160 = por %p158, %p159
      %s162 = sadd.s32 %s161, 1
      %p165 = scmp.eq.s32.totalorder %s22, 1
      %p166 = scmp.ne.s32.totalorder %s161, %s163
      %p167 = scmp.eq.s32.totalorder %s22, 0
      %p168 = por %p166, %p167
      %p169 = scmp.ne.s32.totalorder %s161, %s163
      %p170 = scmp.eq.s32.totalorder %s27, 1
      %p171 = por %p169, %p170
      %p172 = scmp.ne.s32.totalorder %s163, %s164
      %p173 = scmp.eq.s32.totalorder %s27, 0
      %p174 = por %p172, %p173
      %p175 = scmp.ne.s32.totalorder %s163, %s164
      %p176 = scmp.eq.s32.totalorder %s28, 1
      %p177 = por %p175, %p176
      %p179 = scmp.ne.s32.totalorder %s164, %s178
      %p180 = scmp.eq.s32.totalorder %s28, 0
      %p181 = por %p179, %p180
      %s183 = sadd.s32 %s182, 1
      %p186 = scmp.eq.s32.totalorder %s22, 1
      %p187 = scmp.ne.s32.totalorder %s182, %s184
      %p188 = scmp.eq.s32.totalorder %s22, 0
      %p189 = por %p187, %p188
      %p190 = scmp.ne.s32.totalorder %s182, %s184
      %p191 = scmp.eq.s32.totalorder %s27, 1
      %p192 = por %p190, %p191
      %p193 = scmp.ne.s32.totalorder %s184, %s185
      %p194 = scmp.eq.s32.totalorder %s27, 0
      %p195 = por %p193, %p194
      %p196 = scmp.ne.s32.totalorder %s184, %s185
      %p197 = scmp.eq.s32.totalorder %s28, 1
      %p198 = por %p196, %p197
      %p200 = scmp.ne.s32.totalorder %s185, %s199
      %p201 = scmp.eq.s32.totalorder %s28, 0
      %p202 = por %p200, %p201
      %s204 = sadd.s32 %s203, 1
      %p207 = scmp.eq.s32.totalorder %s22, 1
      %p208 = scmp.ne.s32.totalorder %s203, %s205
      %p209 = scmp.eq.s32.totalorder %s22, 0
      %p210 = por %p208, %p209
      %p211 = scmp.ne.s32.totalorder %s203, %s205
      %p212 = scmp.eq.s32.totalorder %s27, 1
      %p213 = por %p211, %p212
      %p214 = scmp.ne.s32.totalorder %s205, %s206
      %p215 = scmp.eq.s32.totalorder %s27, 0
      %p216 = por %p214, %p215
      %p217 = scmp.ne.s32.totalorder %s205, %s206
      %p218 = scmp.eq.s32.totalorder %s28, 1
      %p219 = por %p217, %p218
      %p221 = scmp.ne.s32.totalorder %s206, %s220
      %p222 = scmp.eq.s32.totalorder %s28, 0
      %p223 = por %p221, %p222
      %s225 = sadd.s32 %s224, 1
      %p228 = scmp.eq.s32.totalorder %s22, 1
      %p229 = scmp.ne.s32.totalorder %s224, %s226
      %p230 = scmp.eq.s32.totalorder %s22, 0
      %p231 = por %p229, %p230
      %p232 = scmp.ne.s32.totalorder %s224, %s226
      %p233 = scmp.eq.s32.totalorder %s27, 1
      %p234 = por %p232, %p233
      %p235 = scmp.ne.s32.totalorder %s226, %s227
      %p236 = scmp.eq.s32.totalorder %s27, 0
      %p237 = por %p235, %p236
      %p238 = scmp.ne.s32.totalorder %s226, %s227
      %p239 = scmp.eq.s32.totalorder %s28, 1
      %p240 = por %p238, %p239
      %p242 = scmp.ne.s32.totalorder %s227, %s241
      %p243 = scmp.eq.s32.totalorder %s28, 0
      %p244 = por %p242, %p243
      %s246 = sadd.s32 %s245, 1
      %p249 = scmp.eq.s32.totalorder %s22, 1
      %p250 = scmp.ne.s32.totalorder %s245, %s247
      %p251 = scmp.eq.s32.totalorder %s22, 0
      %p252 = por %p250, %p251
      %p253 = scmp.ne.s32.totalorder %s245, %s247
      %p254 = scmp.eq.s32.totalorder %s27, 1
      %p255 = por %p253, %p254
      %p256 = scmp.ne.s32.totalorder %s247, %s248
      %p257 = scmp.eq.s32.totalorder %s27, 0
      %p258 = por %p256, %p257
      %p259 = scmp.ne.s32.totalorder %s247, %s248
      %p260 = scmp.eq.s32.totalorder %s28, 1
      %p261 = por %p259, %p260
      %p263 = scmp.ne.s32.totalorder %s248, %s262
      %p264 = scmp.eq.s32.totalorder %s28, 0
      %p265 = por %p263, %p264
      %s267 = sadd.s32 %s266, 1
      %p270 = scmp.eq.s32.totalorder %s22, 1
      %p271 = scmp.ne.s32.totalorder %s266, %s268
      %p272 = scmp.eq.s32.totalorder %s22, 0
      %p273 = por %p271, %p272
      %p274 = scmp.ne.s32.totalorder %s266, %s268
      %p275 = scmp.eq.s32.totalorder %s27, 1
      %p276 = por %p274, %p275
      %p277 = scmp.ne.s32.totalorder %s268, %s269
      %p278 = scmp.eq.s32.totalorder %s27, 0
      %p279 = por %p277, %p278
      %p280 = scmp.ne.s32.totalorder %s268, %s269
      %p281 = scmp.eq.s32.totalorder %s28, 1
      %p282 = por %p280, %p281
      %p284 = scmp.ne.s32.totalorder %s269, %s283
      %p285 = scmp.eq.s32.totalorder %s28, 0
      %p286 = por %p284, %p285
      %s288 = sadd.s32 %s287, 1
      %p291 = scmp.eq.s32.totalorder %s22, 1
      %p292 = scmp.ne.s32.totalorder %s287, %s289
      %p293 = scmp.eq.s32.totalorder %s22, 0
      %p294 = por %p292, %p293
      %p295 = scmp.ne.s32.totalorder %s287, %s289
      %p296 = scmp.eq.s32.totalorder %s27, 1
      %p297 = por %p295, %p296
      %p298 = scmp.ne.s32.totalorder %s289, %s290
      %p299 = scmp.eq.s32.totalorder %s27, 0
      %p300 = por %p298, %p299
      %p301 = scmp.ne.s32.totalorder %s289, %s290
      %p302 = scmp.eq.s32.totalorder %s28, 1
      %p303 = por %p301, %p302
      %p305 = scmp.ne.s32.totalorder %s290, %s304
      %p306 = scmp.eq.s32.totalorder %s28, 0
      %p307 = por %p305, %p306
      %s308 = ssub.s32 %s22, %s29
      %p309 = scmp.eq.s32.totalorder %s308, 0
      %s311 = sadd.s32 %s310, 1
      %s312 = scalar_select %p309, %s310, %s311
      %p315 = pneg %p309
      %p316 = scmp.eq.s32.totalorder %s22, 1
      %p317 = por %p315, %p316
      %p318 = scmp.ne.s32.totalorder %s310, %s313
      %p319 = scmp.eq.s32.totalorder %s22, 0
      %p320 = por %p318, %p319
      %p321 = scmp.ne.s32.totalorder %s310, %s313
      %p322 = scmp.eq.s32.totalorder %s27, 1
      %p323 = por %p321, %p322
      %p324 = scmp.ne.s32.totalorder %s313, %s314
      %p325 = scmp.eq.s32.totalorder %s27, 0
      %p326 = por %p324, %p325
      %p327 = scmp.ne.s32.totalorder %s313, %s314
      %p328 = scmp.eq.s32.totalorder %s28, 1
      %p329 = por %p327, %p328
      %p331 = scmp.ne.s32.totalorder %s314, %s330
      %p332 = scmp.eq.s32.totalorder %s28, 0
      %p333 = por %p331, %p332
      %p334 = scmp.le.s32.totalorder 1, %s22
      %p335 = scmp.lt.s32.totalorder %s22, 3
      %p336 = pnand %p334, %p335
      %p337 = pneg %p336
      // Predicated region
      $region9: #{tpu_custom_call.1} parent=5 // pred_check
        _
      $region10: #{tpu_custom_call.1} parent=5 // pred_check_branch
        %339 = sbr.rel (%p336) target = $region12
      $region11: #{tpu_custom_call.1} parent=5 // pred_region
        %s340 = ssub.s32 %s22, 1
        // Predicated region
        $region13: #{tpu_custom_call.1} parent=11 // pred_check
          %p341 = pneg %p69
        $region14: #{tpu_custom_call.1} parent=11 // pred_check_branch
          %343 = sbr.rel (%p341) target = $region16
        $region15: #{tpu_custom_call.1} parent=11 // pred_region
          _
        $region16: #{tpu_custom_call.1} parent=11 // pred_fallthru
          _
        // Predicated region
        $region17: #{tpu_custom_call.1} parent=11 // pred_check
          %p344 = pneg %p90
        $region18: #{tpu_custom_call.1} parent=11 // pred_check_branch
          %346 = sbr.rel (%p344) target = $region20
        $region19: #{tpu_custom_call.1} parent=11 // pred_region
          _
        $region20: #{tpu_custom_call.1} parent=11 // pred_fallthru
          _
        // Predicated region
        $region21: #{tpu_custom_call.1} parent=11 // pred_check
          %p347 = pneg %p111
        $region22: #{tpu_custom_call.1} parent=11 // pred_check_branch
          %349 = sbr.rel (%p347) target = $region24
        $region23: #{tpu_custom_call.1} parent=11 // pred_region
          _
        $region24: #{tpu_custom_call.1} parent=11 // pred_fallthru
          _
        // Predicated region
        $region25: #{tpu_custom_call.1} parent=11 // pred_check
          %p350 = pneg %p132
        $region26: #{tpu_custom_call.1} parent=11 // pred_check_branch
          %352 = sbr.rel (%p350) target = $region28
        $region27: #{tpu_custom_call.1} parent=11 // pred_region
          _
        $region28: #{tpu_custom_call.1} parent=11 // pred_fallthru
          _
        // Predicated region
        $region29: #{tpu_custom_call.1} parent=11 // pred_check
          %p353 = pneg %p153
        $region30: #{tpu_custom_call.1} parent=11 // pred_check_branch
          %355 = sbr.rel (%p353) target = $region32
        $region31: #{tpu_custom_call.1} parent=11 // pred_region
          _
        $region32: #{tpu_custom_call.1} parent=11 // pred_fallthru
          _
        // Predicated region
        $region33: #{tpu_custom_call.1} parent=11 // pred_check
          %p356 = pneg %p174
        $region34: #{tpu_custom_call.1} parent=11 // pred_check_branch
          %358 = sbr.rel (%p356) target = $region36
        $region35: #{tpu_custom_call.1} parent=11 // pred_region
          _
        $region36: #{tpu_custom_call.1} parent=11 // pred_fallthru
          _
        // Predicated region
        $region37: #{tpu_custom_call.1} parent=11 // pred_check
          %p359 = pneg %p195
        $region38: #{tpu_custom_call.1} parent=11 // pred_check_branch
          %361 = sbr.rel (%p359) target = $region40
        $region39: #{tpu_custom_call.1} parent=11 // pred_region
          _
        $region40: #{tpu_custom_call.1} parent=11 // pred_fallthru
          _
        // Predicated region
        $region41: #{tpu_custom_call.1} parent=11 // pred_check
          %p362 = pneg %p216
        $region42: #{tpu_custom_call.1} parent=11 // pred_check_branch
          %364 = sbr.rel (%p362) target = $region44
        $region43: #{tpu_custom_call.1} parent=11 // pred_region
          _
        $region44: #{tpu_custom_call.1} parent=11 // pred_fallthru
          _
        // Predicated region
        $region45: #{tpu_custom_call.1} parent=11 // pred_check
          %p365 = pneg %p237
        $region46: #{tpu_custom_call.1} parent=11 // pred_check_branch
          %367 = sbr.rel (%p365) target = $region48
        $region47: #{tpu_custom_call.1} parent=11 // pred_region
          _
        $region48: #{tpu_custom_call.1} parent=11 // pred_fallthru
          _
        // Predicated region
        $region49: #{tpu_custom_call.1} parent=11 // pred_check
          %p368 = pneg %p258
        $region50: #{tpu_custom_call.1} parent=11 // pred_check_branch
          %370 = sbr.rel (%p368) target = $region52
        $region51: #{tpu_custom_call.1} parent=11 // pred_region
          _
        $region52: #{tpu_custom_call.1} parent=11 // pred_fallthru
          _
        // Predicated region
        $region53: #{tpu_custom_call.1} parent=11 // pred_check
          %p371 = pneg %p279
        $region54: #{tpu_custom_call.1} parent=11 // pred_check_branch
          %373 = sbr.rel (%p371) target = $region56
        $region55: #{tpu_custom_call.1} parent=11 // pred_region
          _
        $region56: #{tpu_custom_call.1} parent=11 // pred_fallthru
          _
        // Predicated region
        $region57: #{tpu_custom_call.1} parent=11 // pred_check
          %p374 = pneg %p300
        $region58: #{tpu_custom_call.1} parent=11 // pred_check_branch
          %376 = sbr.rel (%p374) target = $region60
        $region59: #{tpu_custom_call.1} parent=11 // pred_region
          _
        $region60: #{tpu_custom_call.1} parent=11 // pred_fallthru
          _
      $region12: #{tpu_custom_call.1} parent=5 // pred_fallthru
        _
      %p377 = scmp.lt.s32.totalorder %s22, 2
      // Predicated region
      $region61: #{tpu_custom_call.1} parent=5 // pred_check
        %p378 = pneg %p377
      $region62: #{tpu_custom_call.1} parent=5 // pred_check_branch
        %380 = sbr.rel (%p378) target = $region64
      $region63: #{tpu_custom_call.1} parent=5 // pred_region
        // Predicated region
        $region65: #{tpu_custom_call.1} parent=63 // pred_check
          %p381 = pneg %p42
        $region66: #{tpu_custom_call.1} parent=63 // pred_check_branch
          %383 = sbr.rel (%p381) target = $region68
        $region67: #{tpu_custom_call.1} parent=63 // pred_region
          %p384 = scmp.lt.s32.totalorder %s22, 1
          %s385 = scalar_select %p384, %s22, 1
          %s386 = smul.addr %s385, 8
          %s387 = scalar_lea.vmem %s0, %s386
        $region68: #{tpu_custom_call.1} parent=63 // pred_fallthru
          _
      $region64: #{tpu_custom_call.1} parent=5 // pred_fallthru
        _
      %p388 = scmp.le.s32.totalorder 1, %s22
      %p389 = scmp.lt.s32.totalorder %s22, 3
      %p390 = pnand %p388, %p389
      %p391 = pneg %p390
      // Predicated region
      $region69: #{tpu_custom_call.1} parent=5 // pred_check
        _
      $region70: #{tpu_custom_call.1} parent=5 // pred_check_branch
        %393 = sbr.rel (%p390) target = $region72
      $region71: #{tpu_custom_call.1} parent=5 // pred_region
        %s394 = ssub.s32 %s22, 1
        %p395 = scmp.lt.s32.totalorder %s27, 1
        %s396 = scalar_select %p395, %s27, 1
        %s397 = smul.addr %s396, 8
        %s398 = scalar_lea.vmem %s0, %s397
        %p399 = pneg %p48
        %p400 = pneg %p45
        %p401 = pneg %p69
        %p402 = pneg %p66
        %p403 = pneg %p90
        %p404 = pneg %p87
        %p405 = pneg %p111
        %p406 = pneg %p108
        %p407 = pneg %p132
        %p408 = pneg %p129
        %p409 = pneg %p153
        %p410 = pneg %p150
        %p411 = pneg %p174
        %p412 = pneg %p171
        %p413 = pneg %p195
        %p414 = pneg %p192
        %p415 = pneg %p216
        %p416 = pneg %p213
        %p417 = pneg %p237
        %p418 = pneg %p234
        %p419 = pneg %p258
        %p420 = pneg %p255
        %p421 = pneg %p279
        %p422 = pneg %p276
        %p423 = pneg %p300
        %p424 = pneg %p297
        %p425 = pneg %p326
        %p426 = pneg %p323
        %s427 = sand.u32 %s313, 1
        %s428 = scalar_lea.sflag [#allocation4], %s427
        %s429 = sand.u32 %s313, 1
        %s430 = smul.addr %s429, 8
        %s431 = scalar_lea.vmem [#allocation3], %s430
        %p432 = scmp.lt.s32.totalorder %s27, 1
        %s433 = scalar_select %p432, %s27, 1
        %s434 = smul.addr %s433, 8
        %s435 = scalar_lea.vmem %s0, %s434
        %v436 = vld [vmem:[%s435] sm:$0xff]
        %v437 = vld [vmem:[%s1] sm:$0x1]
        %v438 = vld [vmem:[%s2] sm:$0x1]
        %v439 = vld [vmem:[%s7] sm:$0x1]
        %v440 = vld [vmem:[%s8] sm:$0x1]
        %v441 = vld [vmem:[%s4] sm:$0x1]
        %v442 = vld [vmem:[%s6] sm:$0x1]
        %v443 = vld [vmem:[%s10] sm:$0x1]
        %v444 = vld [vmem:[%s12] sm:$0x1]
        %vm445 = vcmask 261120
        %v446 = vsel %vm445, %v436, 0.0
        %447 = vadd.xlane.f32.xlu0 %v446
        %v448 = vpop.xlane.xlu0 %447
        %v449 = vrcp.pop 32.0
        %v450 = vmul.f32 32.0, %v449
        %v451 = vsub.f32 1.0, %v450
        %v452 = vmul.f32 %v449, %v451
        %v453 = vadd.f32 %v449, %v452
        %vm454 = vweird.f32 %v449
        %v455 = vsel %vm454, %v449, %v453
        %v456 = vmul.f32 %v448, %v455
        %v457 = vsub.f32 %v436, %v456
        %v458 = vmul.f32 %v457, %v457
        %v459 = vsel %vm445, %v458, 0.0
        %460 = vadd.xlane.f32.xlu0 %v459
        %v461 = vpop.xlane.xlu0 %460
        %v462 = vmul.f32 %v461, %v455
        %v463 = vadd.f32 %v462, 1e-05
        %v464 = vrsqrt.pop %v463
        %v465 = vmul.f32 %v464, %v463
        %v466 = vmul.f32 %v465, %v464
        %v467 = vmul.f32 0.5, %v466
        %v468 = vsub.f32 1.5, %v467
        %v469 = vmul.f32 %v464, %v468
        %vm470 = vweird.f32 %v463
        %vm471 = vweird.f32 %v464
        %vm472 = vmor %vm470, %vm471
        %v473 = vsel %vm472, %v464, %v469
        %v474 = vmul.f32 %v457, %v473
        %v476 = vperm.slane %v437, 0
        %v478 = vmul.f32 %v474, %v476
        %v480 = vperm.slane %v438, 0
        %v482 = vadd.f32 %v478, %v480
        %v483 = vld [vmem:[%s3] sm:$0xff]
        %v484 = vld [vmem:[%s3 + $0x8] sm:$0xff]
        %v485 = vld [vmem:[%s3 + $0x10] sm:$0xff]
        %v486 = vld [vmem:[%s3 + $0x18] sm:$0xff]
        %v488 = vperm.slane %v441, 0
        %v491 = vsel %vm445, %v482, 0
        %493 = vmatpush.msra.mxu0 0.0
        %494 = vmatpush.msra.mxu0 0.0
        %495 = vmatpush.msra.mxu0 0.0
        %496 = vmatpush.msra.mxu0 0.0
        %497 = vmatpush.msra.mxu0 0.0
        %498 = vmatpush.msra.mxu0 0.0
        %499 = vmatpush.msra.mxu0 0.0
        %500 = vmatpush.msra.mxu0 0.0
        %501 = vmatpush.msra.mxu0 0.0
        %502 = vmatpush.msra.mxu0 0.0
        %503 = vmatpush.msra.mxu0 0.0
        %504 = vmatpush.msra.mxu0 0.0
        %505 = vmatpush.msra.mxu0 %v486
        %506 = vmatpush.msra.mxu0 %v485
        %507 = vmatpush.msra.mxu0 %v484
        %508 = vmatpush.msra.mxu0 %v483
        %509 = vmatmul.f32.gmra.mxu0 %v491
        %v510 = vpop.f32.mrf.mxu0
        %v511 = vadd.f32 %v488, %v510
        %512 = vdwg.mxu0
        %v513 = vmul.f32 %v511, 0.5
        %515 = vrot.lane.b32.xlu0 %v511, 96
        %v516 = vpop.permute.xlu0 %515
        %vm517 = vcmask 31744
        %v519 = vsel %vm517, %v513, 0
        %v521 = vsel %vm517, %v516, 0
        %523 = vmatpush.xpose.msra.mxu0 0.0
        %524 = vmatpush.xpose.msra.mxu0 0.0
        %525 = vmatpush.xpose.msra.mxu0 0.0
        %526 = vmatpush.xpose.msra.mxu0 0.0
        %527 = vmatpush.xpose.msra.mxu0 0.0
        %528 = vmatpush.xpose.msra.mxu0 0.0
        %529 = vmatpush.xpose.msra.mxu0 0.0
        %530 = vmatpush.xpose.msra.mxu0 0.0
        %531 = vmatpush.xpose.msra.mxu0 0.0
        %532 = vmatpush.xpose.msra.mxu0 0.0
        %533 = vmatpush.xpose.msra.mxu0 0.0
        %534 = vmatpush.xpose.msra.mxu0 0.0
        %535 = vmatpush.xpose.msra.mxu0 0.0
        %536 = vmatpush.xpose.msra.mxu0 0.0
        %537 = vmatpush.xpose.msra.mxu0 0.0
        %538 = vmatpush.xpose.msra.mxu0 %v521
        %539 = vmatmul.f32.gmra.mxu0 %v519
        %v540 = vpop.f32.mrf.mxu0
        %v541 = vadd.f32 0.0, %v540
        %542 = vdwg.mxu0
        %vm543 = vcmask 64512
        %v544 = vsel %vm543, %v541, -inf
        %545 = vmax.xlane.f32.xlu0 %v544
        %v546 = vpop.xlane.xlu0 %545
        %v547 = vsub.f32 %v541, %v546
        %v548 = vmul.f32 %v547, 1.442695
        %v549 = vpow.pop %v548
        %v550 = vsel %vm543, %v549, 0.0
        %551 = vadd.xlane.f32.xlu0 %v550
        %v552 = vpop.xlane.xlu0 %551
        %v553 = vrcp.pop %v552
        %v554 = vmul.f32 %v549, %v553
        %555 = vrot.lane.b32.xlu0 %v511, 64
        %v556 = vpop.permute.xlu0 %555
        %v559 = vsel %vm543, %v554, 0
        %561 = vmatpush.msra.mxu0 0.0
        %562 = vmatpush.msra.mxu0 0.0
        %563 = vmatpush.msra.mxu0 0.0
        %564 = vmatpush.msra.mxu0 0.0
        %565 = vmatpush.msra.mxu0 0.0
        %566 = vmatpush.msra.mxu0 0.0
        %567 = vmatpush.msra.mxu0 0.0
        %568 = vmatpush.msra.mxu0 0.0
        %569 = vmatpush.msra.mxu0 0.0
        %570 = vmatpush.msra.mxu0 0.0
        %571 = vmatpush.msra.mxu0 0.0
        %572 = vmatpush.msra.mxu0 0.0
        %573 = vmatpush.msra.mxu0 0.0
        %574 = vmatpush.msra.mxu0 0.0
        %575 = vmatpush.msra.mxu0 0.0
        %576 = vmatpush.msra.mxu0 %v556
        %577 = vmatmul.f32.gmra.mxu0 %v559
        %v578 = vpop.f32.mrf.mxu0
        %v579 = vadd.f32 0.0, %v578
        %580 = vdwg.mxu0
        %581 = vst.msk [vmem:[#allocation2] sm:$0xff] %vm517, %v579
        %582 = vrot.lane.b32.xlu0 %v513, 124
        %v583 = vpop.permute.xlu0 %582
        %584 = vrot.lane.b32.xlu0 %v511, 92
        %v585 = vpop.permute.xlu0 %584
        %v586 = vsel %vm517, %v583, 0
        %v588 = vsel %vm517, %v585, 0
        %590 = vmatpush.xpose.msra.mxu0 0.0
        %591 = vmatpush.xpose.msra.mxu0 0.0
        %592 = vmatpush.xpose.msra.mxu0 0.0
        %593 = vmatpush.xpose.msra.mxu0 0.0
        %594 = vmatpush.xpose.msra.mxu0 0.0
        %595 = vmatpush.xpose.msra.mxu0 0.0
        %596 = vmatpush.xpose.msra.mxu0 0.0
        %597 = vmatpush.xpose.msra.mxu0 0.0
        %598 = vmatpush.xpose.msra.mxu0 0.0
        %599 = vmatpush.xpose.msra.mxu0 0.0
        %600 = vmatpush.xpose.msra.mxu0 0.0
        %601 = vmatpush.xpose.msra.mxu0 0.0
        %602 = vmatpush.xpose.msra.mxu0 0.0
        %603 = vmatpush.xpose.msra.mxu0 0.0
        %604 = vmatpush.xpose.msra.mxu0 0.0
        %605 = vmatpush.xpose.msra.mxu0 %v588
        %606 = vmatmul.f32.gmra.mxu0 %v586
        %v607 = vpop.f32.mrf.mxu0
        %v608 = vadd.f32 0.0, %v607
        %609 = vdwg.mxu0
        %v610 = vsel %vm543, %v608, -inf
        %611 = vmax.xlane.f32.xlu0 %v610
        %v612 = vpop.xlane.xlu0 %611
        %v613 = vsub.f32 %v608, %v612
        %v614 = vmul.f32 %v613, 1.442695
        %v615 = vpow.pop %v614
        %v616 = vsel %vm543, %v615, 0.0
        %617 = vadd.xlane.f32.xlu0 %v616
        %v618 = vpop.xlane.xlu0 %617
        %v619 = vrcp.pop %v618
        %v620 = vmul.f32 %v615, %v619
        %621 = vrot.lane.b32.xlu0 %v511, 60
        %v622 = vpop.permute.xlu0 %621
        %v625 = vsel %vm543, %v620, 0
        %627 = vmatpush.msra.mxu0 0.0
        %628 = vmatpush.msra.mxu0 0.0
        %629 = vmatpush.msra.mxu0 0.0
        %630 = vmatpush.msra.mxu0 0.0
        %631 = vmatpush.msra.mxu0 0.0
        %632 = vmatpush.msra.mxu0 0.0
        %633 = vmatpush.msra.mxu0 0.0
        %634 = vmatpush.msra.mxu0 0.0
        %635 = vmatpush.msra.mxu0 0.0
        %636 = vmatpush.msra.mxu0 0.0
        %637 = vmatpush.msra.mxu0 0.0
        %638 = vmatpush.msra.mxu0 0.0
        %639 = vmatpush.msra.mxu0 0.0
        %640 = vmatpush.msra.mxu0 0.0
        %641 = vmatpush.msra.mxu0 0.0
        %642 = vmatpush.msra.mxu0 %v622
        %643 = vmatmul.f32.gmra.mxu0 %v625
        %v644 = vpop.f32.mrf.mxu0
        %v645 = vadd.f32 0.0, %v644
        %646 = vdwg.mxu0
        %648 = vrot.lane.b32.xlu0 %v645, 4
        %v649 = vpop.permute.xlu0 %648
        %vm651 = vcmask 64544
        %652 = vst.msk [vmem:[#allocation2] sm:$0xff] %vm651, %v649
        %653 = vrot.lane.b32.xlu0 %v513, 120
        %v654 = vpop.permute.xlu0 %653
        %655 = vrot.lane.b32.xlu0 %v511, 88
        %v656 = vpop.permute.xlu0 %655
        %v657 = vsel %vm517, %v654, 0
        %v659 = vsel %vm517, %v656, 0
        %661 = vmatpush.xpose.msra.mxu0 0.0
        %662 = vmatpush.xpose.msra.mxu0 0.0
        %663 = vmatpush.xpose.msra.mxu0 0.0
        %664 = vmatpush.xpose.msra.mxu0 0.0
        %665 = vmatpush.xpose.msra.mxu0 0.0
        %666 = vmatpush.xpose.msra.mxu0 0.0
        %667 = vmatpush.xpose.msra.mxu0 0.0
        %668 = vmatpush.xpose.msra.mxu0 0.0
        %669 = vmatpush.xpose.msra.mxu0 0.0
        %670 = vmatpush.xpose.msra.mxu0 0.0
        %671 = vmatpush.xpose.msra.mxu0 0.0
        %672 = vmatpush.xpose.msra.mxu0 0.0
        %673 = vmatpush.xpose.msra.mxu0 0.0
        %674 = vmatpush.xpose.msra.mxu0 0.0
        %675 = vmatpush.xpose.msra.mxu0 0.0
        %676 = vmatpush.xpose.msra.mxu0 %v659
        %677 = vmatmul.f32.gmra.mxu0 %v657
        %v678 = vpop.f32.mrf.mxu0
        %v679 = vadd.f32 0.0, %v678
        %680 = vdwg.mxu0
        %v681 = vsel %vm543, %v679, -inf
        %682 = vmax.xlane.f32.xlu0 %v681
        %v683 = vpop.xlane.xlu0 %682
        %v684 = vsub.f32 %v679, %v683
        %v685 = vmul.f32 %v684, 1.442695
        %v686 = vpow.pop %v685
        %v687 = vsel %vm543, %v686, 0.0
        %688 = vadd.xlane.f32.xlu0 %v687
        %v689 = vpop.xlane.xlu0 %688
        %v690 = vrcp.pop %v689
        %v691 = vmul.f32 %v686, %v690
        %692 = vrot.lane.b32.xlu0 %v511, 56
        %v693 = vpop.permute.xlu0 %692
        %v696 = vsel %vm543, %v691, 0
        %698 = vmatpush.msra.mxu0 0.0
        %699 = vmatpush.msra.mxu0 0.0
        %700 = vmatpush.msra.mxu0 0.0
        %701 = vmatpush.msra.mxu0 0.0
        %702 = vmatpush.msra.mxu0 0.0
        %703 = vmatpush.msra.mxu0 0.0
        %704 = vmatpush.msra.mxu0 0.0
        %705 = vmatpush.msra.mxu0 0.0
        %706 = vmatpush.msra.mxu0 0.0
        %707 = vmatpush.msra.mxu0 0.0
        %708 = vmatpush.msra.mxu0 0.0
        %709 = vmatpush.msra.mxu0 0.0
        %710 = vmatpush.msra.mxu0 0.0
        %711 = vmatpush.msra.mxu0 0.0
        %712 = vmatpush.msra.mxu0 0.0
        %713 = vmatpush.msra.mxu0 %v693
        %714 = vmatmul.f32.gmra.mxu0 %v696
        %v715 = vpop.f32.mrf.mxu0
        %v716 = vadd.f32 0.0, %v715
        %717 = vdwg.mxu0
        %719 = vrot.lane.b32.xlu0 %v716, 8
        %v720 = vpop.permute.xlu0 %719
        %vm722 = vcmask 97344
        %723 = vst.msk [vmem:[#allocation2] sm:$0xff] %vm722, %v720
        %724 = vrot.lane.b32.xlu0 %v513, 116
        %v725 = vpop.permute.xlu0 %724
        %726 = vrot.lane.b32.xlu0 %v511, 84
        %v727 = vpop.permute.xlu0 %726
        %v728 = vsel %vm517, %v725, 0
        %v730 = vsel %vm517, %v727, 0
        %732 = vmatpush.xpose.msra.mxu0 0.0
        %733 = vmatpush.xpose.msra.mxu0 0.0
        %734 = vmatpush.xpose.msra.mxu0 0.0
        %735 = vmatpush.xpose.msra.mxu0 0.0
        %736 = vmatpush.xpose.msra.mxu0 0.0
        %737 = vmatpush.xpose.msra.mxu0 0.0
        %738 = vmatpush.xpose.msra.mxu0 0.0
        %739 = vmatpush.xpose.msra.mxu0 0.0
        %740 = vmatpush.xpose.msra.mxu0 0.0
        %741 = vmatpush.xpose.msra.mxu0 0.0
        %742 = vmatpush.xpose.msra.mxu0 0.0
        %743 = vmatpush.xpose.msra.mxu0 0.0
        %744 = vmatpush.xpose.msra.mxu0 0.0
        %745 = vmatpush.xpose.msra.mxu0 0.0
        %746 = vmatpush.xpose.msra.mxu0 0.0
        %747 = vmatpush.xpose.msra.mxu0 %v730
        %748 = vmatmul.f32.gmra.mxu0 %v728
        %v749 = vpop.f32.mrf.mxu0
        %v750 = vadd.f32 0.0, %v749
        %751 = vdwg.mxu0
        %v752 = vsel %vm543, %v750, -inf
        %753 = vmax.xlane.f32.xlu0 %v752
        %v754 = vpop.xlane.xlu0 %753
        %v755 = vsub.f32 %v750, %v754
        %v756 = vmul.f32 %v755, 1.442695
        %v757 = vpow.pop %v756
        %v758 = vsel %vm543, %v757, 0.0
        %759 = vadd.xlane.f32.xlu0 %v758
        %v760 = vpop.xlane.xlu0 %759
        %v761 = vrcp.pop %v760
        %v762 = vmul.f32 %v757, %v761
        %763 = vrot.lane.b32.xlu0 %v511, 52
        %v764 = vpop.permute.xlu0 %763
        %v767 = vsel %vm543, %v762, 0
        %769 = vmatpush.msra.mxu0 0.0
        %770 = vmatpush.msra.mxu0 0.0
        %771 = vmatpush.msra.mxu0 0.0
        %772 = vmatpush.msra.mxu0 0.0
        %773 = vmatpush.msra.mxu0 0.0
        %774 = vmatpush.msra.mxu0 0.0
        %775 = vmatpush.msra.mxu0 0.0
        %776 = vmatpush.msra.mxu0 0.0
        %777 = vmatpush.msra.mxu0 0.0
        %778 = vmatpush.msra.mxu0 0.0
        %779 = vmatpush.msra.mxu0 0.0
        %780 = vmatpush.msra.mxu0 0.0
        %781 = vmatpush.msra.mxu0 0.0
        %782 = vmatpush.msra.mxu0 0.0
        %783 = vmatpush.msra.mxu0 0.0
        %784 = vmatpush.msra.mxu0 %v764
        %785 = vmatmul.f32.gmra.mxu0 %v767
        %v786 = vpop.f32.mrf.mxu0
        %v787 = vadd.f32 0.0, %v786
        %788 = vdwg.mxu0
        %790 = vrot.lane.b32.xlu0 %v787, 12
        %v791 = vpop.permute.xlu0 %790
        %vm793 = vcmask 130144
        %794 = vst.msk [vmem:[#allocation2] sm:$0xff] %vm793, %v791
        %795 = vrot.lane.b32.xlu0 %v513, 112
        %v796 = vpop.permute.xlu0 %795
        %797 = vrot.lane.b32.xlu0 %v511, 80
        %v798 = vpop.permute.xlu0 %797
        %v799 = vsel %vm517, %v796, 0
        %v801 = vsel %vm517, %v798, 0
        %803 = vmatpush.xpose.msra.mxu0 0.0
        %804 = vmatpush.xpose.msra.mxu0 0.0
        %805 = vmatpush.xpose.msra.mxu0 0.0
        %806 = vmatpush.xpose.msra.mxu0 0.0
        %807 = vmatpush.xpose.msra.mxu0 0.0
        %808 = vmatpush.xpose.msra.mxu0 0.0
        %809 = vmatpush.xpose.msra.mxu0 0.0
        %810 = vmatpush.xpose.msra.mxu0 0.0
        %811 = vmatpush.xpose.msra.mxu0 0.0
        %812 = vmatpush.xpose.msra.mxu0 0.0
        %813 = vmatpush.xpose.msra.mxu0 0.0
        %814 = vmatpush.xpose.msra.mxu0 0.0
        %815 = vmatpush.xpose.msra.mxu0 0.0
        %816 = vmatpush.xpose.msra.mxu0 0.0
        %817 = vmatpush.xpose.msra.mxu0 0.0
        %818 = vmatpush.xpose.msra.mxu0 %v801
        %819 = vmatmul.f32.gmra.mxu0 %v799
        %v820 = vpop.f32.mrf.mxu0
        %v821 = vadd.f32 0.0, %v820
        %822 = vdwg.mxu0
        %v823 = vsel %vm543, %v821, -inf
        %824 = vmax.xlane.f32.xlu0 %v823
        %v825 = vpop.xlane.xlu0 %824
        %v826 = vsub.f32 %v821, %v825
        %v827 = vmul.f32 %v826, 1.442695
        %v828 = vpow.pop %v827
        %v829 = vsel %vm543, %v828, 0.0
        %830 = vadd.xlane.f32.xlu0 %v829
        %v831 = vpop.xlane.xlu0 %830
        %v832 = vrcp.pop %v831
        %v833 = vmul.f32 %v828, %v832
        %834 = vrot.lane.b32.xlu0 %v511, 48
        %v835 = vpop.permute.xlu0 %834
        %v838 = vsel %vm543, %v833, 0
        %840 = vmatpush.msra.mxu0 0.0
        %841 = vmatpush.msra.mxu0 0.0
        %842 = vmatpush.msra.mxu0 0.0
        %843 = vmatpush.msra.mxu0 0.0
        %844 = vmatpush.msra.mxu0 0.0
        %845 = vmatpush.msra.mxu0 0.0
        %846 = vmatpush.msra.mxu0 0.0
        %847 = vmatpush.msra.mxu0 0.0
        %848 = vmatpush.msra.mxu0 0.0
        %849 = vmatpush.msra.mxu0 0.0
        %850 = vmatpush.msra.mxu0 0.0
        %851 = vmatpush.msra.mxu0 0.0
        %852 = vmatpush.msra.mxu0 0.0
        %853 = vmatpush.msra.mxu0 0.0
        %854 = vmatpush.msra.mxu0 0.0
        %855 = vmatpush.msra.mxu0 %v835
        %856 = vmatmul.f32.gmra.mxu0 %v838
        %v857 = vpop.f32.mrf.mxu0
        %v858 = vadd.f32 0.0, %v857
        %859 = vdwg.mxu0
        %861 = vrot.lane.b32.xlu0 %v858, 16
        %v862 = vpop.permute.xlu0 %861
        %vm864 = vcmask 162944
        %865 = vst.msk [vmem:[#allocation2] sm:$0xff] %vm864, %v862
        %866 = vrot.lane.b32.xlu0 %v513, 108
        %v867 = vpop.permute.xlu0 %866
        %868 = vrot.lane.b32.xlu0 %v511, 76
        %v869 = vpop.permute.xlu0 %868
        %v870 = vsel %vm517, %v867, 0
        %v872 = vsel %vm517, %v869, 0
        %874 = vmatpush.xpose.msra.mxu0 0.0
        %875 = vmatpush.xpose.msra.mxu0 0.0
        %876 = vmatpush.xpose.msra.mxu0 0.0
        %877 = vmatpush.xpose.msra.mxu0 0.0
        %878 = vmatpush.xpose.msra.mxu0 0.0
        %879 = vmatpush.xpose.msra.mxu0 0.0
        %880 = vmatpush.xpose.msra.mxu0 0.0
        %881 = vmatpush.xpose.msra.mxu0 0.0
        %882 = vmatpush.xpose.msra.mxu0 0.0
        %883 = vmatpush.xpose.msra.mxu0 0.0
        %884 = vmatpush.xpose.msra.mxu0 0.0
        %885 = vmatpush.xpose.msra.mxu0 0.0
        %886 = vmatpush.xpose.msra.mxu0 0.0
        %887 = vmatpush.xpose.msra.mxu0 0.0
        %888 = vmatpush.xpose.msra.mxu0 0.0
        %889 = vmatpush.xpose.msra.mxu0 %v872
        %890 = vmatmul.f32.gmra.mxu0 %v870
        %v891 = vpop.f32.mrf.mxu0
        %v892 = vadd.f32 0.0, %v891
        %893 = vdwg.mxu0
        %v894 = vsel %vm543, %v892, -inf
        %895 = vmax.xlane.f32.xlu0 %v894
        %v896 = vpop.xlane.xlu0 %895
        %v897 = vsub.f32 %v892, %v896
        %v898 = vmul.f32 %v897, 1.442695
        %v899 = vpow.pop %v898
        %v900 = vsel %vm543, %v899, 0.0
        %901 = vadd.xlane.f32.xlu0 %v900
        %v902 = vpop.xlane.xlu0 %901
        %v903 = vrcp.pop %v902
        %v904 = vmul.f32 %v899, %v903
        %905 = vrot.lane.b32.xlu0 %v511, 44
        %v906 = vpop.permute.xlu0 %905
        %v909 = vsel %vm543, %v904, 0
        %911 = vmatpush.msra.mxu0 0.0
        %912 = vmatpush.msra.mxu0 0.0
        %913 = vmatpush.msra.mxu0 0.0
        %914 = vmatpush.msra.mxu0 0.0
        %915 = vmatpush.msra.mxu0 0.0
        %916 = vmatpush.msra.mxu0 0.0
        %917 = vmatpush.msra.mxu0 0.0
        %918 = vmatpush.msra.mxu0 0.0
        %919 = vmatpush.msra.mxu0 0.0
        %920 = vmatpush.msra.mxu0 0.0
        %921 = vmatpush.msra.mxu0 0.0
        %922 = vmatpush.msra.mxu0 0.0
        %923 = vmatpush.msra.mxu0 0.0
        %924 = vmatpush.msra.mxu0 0.0
        %925 = vmatpush.msra.mxu0 0.0
        %926 = vmatpush.msra.mxu0 %v906
        %927 = vmatmul.f32.gmra.mxu0 %v909
        %v928 = vpop.f32.mrf.mxu0
        %v929 = vadd.f32 0.0, %v928
        %930 = vdwg.mxu0
        %932 = vrot.lane.b32.xlu0 %v929, 20
        %v933 = vpop.permute.xlu0 %932
        %vm935 = vcmask 195744
        %936 = vst.msk [vmem:[#allocation2] sm:$0xff] %vm935, %v933
        %937 = vrot.lane.b32.xlu0 %v513, 104
        %v938 = vpop.permute.xlu0 %937
        %939 = vrot.lane.b32.xlu0 %v511, 72
        %v940 = vpop.permute.xlu0 %939
        %v941 = vsel %vm517, %v938, 0
        %v943 = vsel %vm517, %v940, 0
        %945 = vmatpush.xpose.msra.mxu0 0.0
        %946 = vmatpush.xpose.msra.mxu0 0.0
        %947 = vmatpush.xpose.msra.mxu0 0.0
        %948 = vmatpush.xpose.msra.mxu0 0.0
        %949 = vmatpush.xpose.msra.mxu0 0.0
        %950 = vmatpush.xpose.msra.mxu0 0.0
        %951 = vmatpush.xpose.msra.mxu0 0.0
        %952 = vmatpush.xpose.msra.mxu0 0.0
        %953 = vmatpush.xpose.msra.mxu0 0.0
        %954 = vmatpush.xpose.msra.mxu0 0.0
        %955 = vmatpush.xpose.msra.mxu0 0.0
        %956 = vmatpush.xpose.msra.mxu0 0.0
        %957 = vmatpush.xpose.msra.mxu0 0.0
        %958 = vmatpush.xpose.msra.mxu0 0.0
        %959 = vmatpush.xpose.msra.mxu0 0.0
        %960 = vmatpush.xpose.msra.mxu0 %v943
        %961 = vmatmul.f32.gmra.mxu0 %v941
        %v962 = vpop.f32.mrf.mxu0
        %v963 = vadd.f32 0.0, %v962
        %964 = vdwg.mxu0
        %v965 = vsel %vm543, %v963, -inf
        %966 = vmax.xlane.f32.xlu0 %v965
        %v967 = vpop.xlane.xlu0 %966
        %v968 = vsub.f32 %v963, %v967
        %v969 = vmul.f32 %v968, 1.442695
        %v970 = vpow.pop %v969
        %v971 = vsel %vm543, %v970, 0.0
        %972 = vadd.xlane.f32.xlu0 %v971
        %v973 = vpop.xlane.xlu0 %972
        %v974 = vrcp.pop %v973
        %v975 = vmul.f32 %v970, %v974
        %976 = vrot.lane.b32.xlu0 %v511, 40
        %v977 = vpop.permute.xlu0 %976
        %v980 = vsel %vm543, %v975, 0
        %982 = vmatpush.msra.mxu0 0.0
        %983 = vmatpush.msra.mxu0 0.0
        %984 = vmatpush.msra.mxu0 0.0
        %985 = vmatpush.msra.mxu0 0.0
        %986 = vmatpush.msra.mxu0 0.0
        %987 = vmatpush.msra.mxu0 0.0
        %988 = vmatpush.msra.mxu0 0.0
        %989 = vmatpush.msra.mxu0 0.0
        %990 = vmatpush.msra.mxu0 0.0
        %991 = vmatpush.msra.mxu0 0.0
        %992 = vmatpush.msra.mxu0 0.0
        %993 = vmatpush.msra.mxu0 0.0
        %994 = vmatpush.msra.mxu0 0.0
        %995 = vmatpush.msra.mxu0 0.0
        %996 = vmatpush.msra.mxu0 0.0
        %997 = vmatpush.msra.mxu0 %v977
        %998 = vmatmul.f32.gmra.mxu0 %v980
        %v999 = vpop.f32.mrf.mxu0
        %v1000 = vadd.f32 0.0, %v999
        %1001 = vdwg.mxu0
        %1003 = vrot.lane.b32.xlu0 %v1000, 24
        %v1004 = vpop.permute.xlu0 %1003
        %vm1006 = vcmask 228544
        %1007 = vst.msk [vmem:[#allocation2] sm:$0xff] %vm1006, %v1004
        %1008 = vrot.lane.b32.xlu0 %v513, 100
        %v1009 = vpop.permute.xlu0 %1008
        %1010 = vrot.lane.b32.xlu0 %v511, 68
        %v1011 = vpop.permute.xlu0 %1010
        %v1012 = vsel %vm517, %v1009, 0
        %v1014 = vsel %vm517, %v1011, 0
        %1016 = vmatpush.xpose.msra.mxu0 0.0
        %1017 = vmatpush.xpose.msra.mxu0 0.0
        %1018 = vmatpush.xpose.msra.mxu0 0.0
        %1019 = vmatpush.xpose.msra.mxu0 0.0
        %1020 = vmatpush.xpose.msra.mxu0 0.0
        %1021 = vmatpush.xpose.msra.mxu0 0.0
        %1022 = vmatpush.xpose.msra.mxu0 0.0
        %1023 = vmatpush.xpose.msra.mxu0 0.0
        %1024 = vmatpush.xpose.msra.mxu0 0.0
        %1025 = vmatpush.xpose.msra.mxu0 0.0
        %1026 = vmatpush.xpose.msra.mxu0 0.0
        %1027 = vmatpush.xpose.msra.mxu0 0.0
        %1028 = vmatpush.xpose.msra.mxu0 0.0
        %1029 = vmatpush.xpose.msra.mxu0 0.0
        %1030 = vmatpush.xpose.msra.mxu0 0.0
        %1031 = vmatpush.xpose.msra.mxu0 %v1014
        %1032 = vmatmul.f32.gmra.mxu0 %v1012
        %v1033 = vpop.f32.mrf.mxu0
        %v1034 = vadd.f32 0.0, %v1033
        %1035 = vdwg.mxu0
        %v1036 = vsel %vm543, %v1034, -inf
        %1037 = vmax.xlane.f32.xlu0 %v1036
        %v1038 = vpop.xlane.xlu0 %1037
        %v1039 = vsub.f32 %v1034, %v1038
        %v1040 = vmul.f32 %v1039, 1.442695
        %v1041 = vpow.pop %v1040
        %v1042 = vsel %vm543, %v1041, 0.0
        %1043 = vadd.xlane.f32.xlu0 %v1042
        %v1044 = vpop.xlane.xlu0 %1043
        %v1045 = vrcp.pop %v1044
        %v1046 = vmul.f32 %v1041, %v1045
        %1047 = vrot.lane.b32.xlu0 %v511, 36
        %v1048 = vpop.permute.xlu0 %1047
        %v1051 = vsel %vm543, %v1046, 0
        %1053 = vmatpush.msra.mxu0 0.0
        %1054 = vmatpush.msra.mxu0 0.0
        %1055 = vmatpush.msra.mxu0 0.0
        %1056 = vmatpush.msra.mxu0 0.0
        %1057 = vmatpush.msra.mxu0 0.0
        %1058 = vmatpush.msra.mxu0 0.0
        %1059 = vmatpush.msra.mxu0 0.0
        %1060 = vmatpush.msra.mxu0 0.0
        %1061 = vmatpush.msra.mxu0 0.0
        %1062 = vmatpush.msra.mxu0 0.0
        %1063 = vmatpush.msra.mxu0 0.0
        %1064 = vmatpush.msra.mxu0 0.0
        %1065 = vmatpush.msra.mxu0 0.0
        %1066 = vmatpush.msra.mxu0 0.0
        %1067 = vmatpush.msra.mxu0 0.0
        %1068 = vmatpush.msra.mxu0 %v1048
        %1069 = vmatmul.f32.gmra.mxu0 %v1051
        %v1070 = vpop.f32.mrf.mxu0
        %v1071 = vadd.f32 0.0, %v1070
        %1072 = vdwg.mxu0
        %1074 = vrot.lane.b32.xlu0 %v1071, 28
        %v1075 = vpop.permute.xlu0 %1074
        %vm1077 = vcmask 261344
        %1078 = vst.msk [vmem:[#allocation2] sm:$0xff] %vm1077, %v1075
        %v1079 = vld [vmem:[#allocation2] sm:$0xff]
        %v1080 = vld [vmem:[%s5] sm:$0xff]
        %v1081 = vld [vmem:[%s5 + $0x8] sm:$0xff]
        %v1082 = vld [vmem:[%s5 + $0x10] sm:$0xff]
        %v1083 = vld [vmem:[%s5 + $0x18] sm:$0xff]
        %v1085 = vperm.slane %v442, 0
        %v1088 = vsel %vm445, %v1079, 0
        %1090 = vmatpush.msra.mxu0 0.0
        %1091 = vmatpush.msra.mxu0 0.0
        %1092 = vmatpush.msra.mxu0 0.0
        %1093 = vmatpush.msra.mxu0 0.0
        %1094 = vmatpush.msra.mxu0 0.0
        %1095 = vmatpush.msra.mxu0 0.0
        %1096 = vmatpush.msra.mxu0 0.0
        %1097 = vmatpush.msra.mxu0 0.0
        %1098 = vmatpush.msra.mxu0 0.0
        %1099 = vmatpush.msra.mxu0 0.0
        %1100 = vmatpush.msra.mxu0 0.0
        %1101 = vmatpush.msra.mxu0 0.0
        %1102 = vmatpush.msra.mxu0 %v1083
        %1103 = vmatpush.msra.mxu0 %v1082
        %1104 = vmatpush.msra.mxu0 %v1081
        %1105 = vmatpush.msra.mxu0 %v1080
        %1106 = vmatmul.f32.gmra.mxu0 %v1088
        %v1107 = vpop.f32.mrf.mxu0
        %v1108 = vadd.f32 %v1085, %v1107
        %1109 = vdwg.mxu0
        %v1110 = vadd.f32 %v436, %v1108
        %v1111 = vsel %vm445, %v1110, 0.0
        %1112 = vadd.xlane.f32.xlu0 %v1111
        %v1113 = vpop.xlane.xlu0 %1112
        %v1114 = vmul.f32 %v1113, %v455
        %v1115 = vsub.f32 %v1110, %v1114
        %v1116 = vmul.f32 %v1115, %v1115
        %v1117 = vsel %vm445, %v1116, 0.0
        %1118 = vadd.xlane.f32.xlu0 %v1117
        %v1119 = vpop.xlane.xlu0 %1118
        %v1120 = vmul.f32 %v1119, %v455
        %v1121 = vadd.f32 %v1120, 1e-05
        %v1122 = vrsqrt.pop %v1121
        %v1123 = vmul.f32 %v1122, %v1121
        %v1124 = vmul.f32 %v1123, %v1122
        %v1125 = vmul.f32 0.5, %v1124
        %v1126 = vsub.f32 1.5, %v1125
        %v1127 = vmul.f32 %v1122, %v1126
        %vm1128 = vweird.f32 %v1121
        %vm1129 = vweird.f32 %v1122
        %vm1130 = vmor %vm1128, %vm1129
        %v1131 = vsel %vm1130, %v1122, %v1127
        %v1132 = vmul.f32 %v1115, %v1131
        %v1134 = vperm.slane %v439, 0
        %v1136 = vmul.f32 %v1132, %v1134
        %v1138 = vperm.slane %v440, 0
        %v1140 = vadd.f32 %v1136, %v1138
        %v1141 = vld [vmem:[%s9] sm:$0xff]
        %v1142 = vld [vmem:[%s9 + $0x8] sm:$0xff]
        %v1143 = vld [vmem:[%s9 + $0x10] sm:$0xff]
        %v1144 = vld [vmem:[%s9 + $0x18] sm:$0xff]
        %v1146 = vperm.slane %v443, 0
        %v1149 = vsel %vm445, %v1140, 0
        %1151 = vmatpush.msra.mxu0 0.0
        %1152 = vmatpush.msra.mxu0 0.0
        %1153 = vmatpush.msra.mxu0 0.0
        %1154 = vmatpush.msra.mxu0 0.0
        %1155 = vmatpush.msra.mxu0 0.0
        %1156 = vmatpush.msra.mxu0 0.0
        %1157 = vmatpush.msra.mxu0 0.0
        %1158 = vmatpush.msra.mxu0 0.0
        %1159 = vmatpush.msra.mxu0 0.0
        %1160 = vmatpush.msra.mxu0 0.0
        %1161 = vmatpush.msra.mxu0 0.0
        %1162 = vmatpush.msra.mxu0 0.0
        %1163 = vmatpush.msra.mxu0 %v1144
        %1164 = vmatpush.msra.mxu0 %v1143
        %1165 = vmatpush.msra.mxu0 %v1142
        %1166 = vmatpush.msra.mxu0 %v1141
        %1167 = vmatmul.f32.gmra.mxu0 %v1149
        %v1168 = vpop.f32.mrf.mxu0
        %v1169 = vadd.f32 %v1146, %v1168
        %1170 = vdwg.mxu0
        %v1171 = vmul.f32 %v1169, 0.5
        %v1172 = vmul.f32 %v1169, 0.044715
        %v1173 = vmul.f32 %v1172, %v1169
        %v1174 = vmul.f32 %v1173, %v1169
        %v1175 = vadd.f32 %v1169, %v1174
        %v1176 = vmul.f32 %v1175, 0.7978846
        %v1177 = vtanh.pop %v1176
        %v1178 = vadd.f32 %v1177, 1.0
        %v1179 = vmul.f32 %v1171, %v1178
        %v1180 = vld [vmem:[%s11] sm:$0xff]
        %v1181 = vld [vmem:[%s11 + $0x8] sm:$0xff]
        %v1182 = vld [vmem:[%s11 + $0x10] sm:$0xff]
        %v1183 = vld [vmem:[%s11 + $0x18] sm:$0xff]
        %v1184 = vld [vmem:[%s11 + $0x20] sm:$0xff]
        %v1185 = vld [vmem:[%s11 + $0x28] sm:$0xff]
        %v1186 = vld [vmem:[%s11 + $0x30] sm:$0xff]
        %v1187 = vld [vmem:[%s11 + $0x38] sm:$0xff]
        %v1188 = vld [vmem:[%s11 + $0x40] sm:$0xff]
        %v1189 = vld [vmem:[%s11 + $0x48] sm:$0xff]
        %v1190 = vld [vmem:[%s11 + $0x50] sm:$0xff]
        %v1191 = vld [vmem:[%s11 + $0x58] sm:$0xff]
        %v1192 = vld [vmem:[%s11 + $0x60] sm:$0xff]
        %v1193 = vld [vmem:[%s11 + $0x68] sm:$0xff]
        %v1194 = vld [vmem:[%s11 + $0x70] sm:$0xff]
        %v1195 = vld [vmem:[%s11 + $0x78] sm:$0xff]
        %v1197 = vperm.slane %v444, 0
        %1199 = vmatpush.msra.mxu0 %v1195
        %1200 = vmatpush.msra.mxu0 %v1194
        %1201 = vmatpush.msra.mxu0 %v1193
        %1202 = vmatpush.msra.mxu0 %v1192
        %1203 = vmatpush.msra.mxu0 %v1191
        %1204 = vmatpush.msra.mxu0 %v1190
        %1205 = vmatpush.msra.mxu0 %v1189
        %1206 = vmatpush.msra.mxu0 %v1188
        %1207 = vmatpush.msra.mxu0 %v1187
        %1208 = vmatpush.msra.mxu0 %v1186
        %1209 = vmatpush.msra.mxu0 %v1185
        %1210 = vmatpush.msra.mxu0 %v1184
        %1211 = vmatpush.msra.mxu0 %v1183
        %1212 = vmatpush.msra.mxu0 %v1182
        %1213 = vmatpush.msra.mxu0 %v1181
        %1214 = vmatpush.msra.mxu0 %v1180
        %1215 = vmatmul.f32.gmra.mxu0 %v1179
        %v1216 = vpop.f32.mrf.mxu0
        %v1217 = vadd.f32 %v1197, %v1216
        %1218 = vdwg.mxu0
        %v1219 = vmul.f32 %v1217, 0.5
        %v1220 = vmul.f32 %v1217, 0.044715
        %v1221 = vmul.f32 %v1220, %v1217
        %v1222 = vmul.f32 %v1221, %v1217
        %v1223 = vadd.f32 %v1217, %v1222
        %v1224 = vmul.f32 %v1223, 0.7978846
        %v1225 = vtanh.pop %v1224
        %v1226 = vadd.f32 %v1225, 1.0
        %v1227 = vmul.f32 %v1219, %v1226
        %v1228 = vadd.f32 %v1110, %v1227
        %1229 = vst.msk [vmem:[%s431] sm:$0xff] %vm445, %v1228
        %s1230 = sand.u32 %s313, 1
        %s1231 = scalar_lea.sflag [#allocation4], %s1230
        %s1232 = sand.u32 %s313, 1
        %s1233 = smul.addr %s1232, 8
        %s1234 = scalar_lea.vmem [#allocation3], %s1233
        // Predicated region
        $region73: #{tpu_custom_call.1} parent=71 // pred_check
          %p1235 = pneg %p323
        $region74: #{tpu_custom_call.1} parent=71 // pred_check_branch
          %1237 = sbr.rel (%p1235) target = $region76
        $region75: #{tpu_custom_call.1} parent=71 // pred_region
          %1239 = vsyncadd %s1231, 0
          %s1240 = smul.addr %s27, 8
          %s1241 = scalar_lea.hbm %s13, %s1240
          %s1243 = sshll.u32 %s1234, 4
          %s1244 = int_to_ptr.vmem [resolvable:$true] %s1243
          %s1245 = sshll.u32 %s1241, 4
          %s1246 = int_to_ptr.hbm [resolvable:$true] %s1245
          %1248 = dma.vmem_to_hbm [thread:$0]  %s1244, 128, %s1246, %s1231
        $region76: #{tpu_custom_call.1} parent=71 // pred_fallthru
          _
      $region72: #{tpu_custom_call.1} parent=5 // pred_fallthru
        _
      %p1249 = scmp.le.s32.totalorder 2, %s22
      // Predicated region
      $region77: #{tpu_custom_call.1} parent=5 // pred_check
        %p1250 = pneg %p1249
      $region78: #{tpu_custom_call.1} parent=5 // pred_check_branch
        %1252 = sbr.rel (%p1250) target = $region80
      $region79: #{tpu_custom_call.1} parent=5 // pred_region
        %s1253 = ssub.s32 %s22, 2
        // Predicated region
        $region81: #{tpu_custom_call.1} parent=79 // pred_check
          %p1254 = pneg %p329
        $region82: #{tpu_custom_call.1} parent=79 // pred_check_branch
          %1256 = sbr.rel (%p1254) target = $region84
        $region83: #{tpu_custom_call.1} parent=79 // pred_region
          %s1257 = sand.u32 %s314, 1
          %s1258 = scalar_lea.sflag [#allocation4], %s1257
          %s1259 = sand.u32 %s314, 1
          %s1260 = smul.addr %s1259, 8
          %s1261 = scalar_lea.vmem [#allocation3], %s1260
          %1263 = dma.done %s1258, 128
        $region84: #{tpu_custom_call.1} parent=79 // pred_fallthru
          _
      $region80: #{tpu_custom_call.1} parent=5 // pred_fallthru
        _
    $region6: #{tpu_custom_call.1} parent=1 // loop_footer
      %s26 = sadd.s32 1, %s22
    $region7: #{tpu_custom_call.1} parent=1 // loop_footer_branch
      %21 = sbr.rel target = $region3
    $region8: #{tpu_custom_call.1} parent=1 // loop_exit
      _
    %1264 = vsyncpa [#allocation4], 1
    %s1265 = scalar_lea.sflag [#allocation4], 1
    %1266 = vsyncpa %s1265, 1

</llo_original>
